<compile_context>
chip_gen: v5e
topology: v5e:2x2
jax: 0.10.0
libtpu: 0.0.40
codegen_flags: <defaults>
</compile_context>

<pallas_src>
import functools

import jax
import jax.numpy as jnp
from jax.experimental import pallas as pl
from jax.experimental.pallas import tpu as pltpu


def _round_up(n, m):
    return ((n + m - 1) // m) * m


def _g2vmod_kernel(x_ref,
                   w1_ref, b1_ref, w2_ref, b2_ref, w3_ref, b3_ref,
                   wo1_ref, bo1_ref, wo2_ref, bo2_ref, wo3_ref, bo3_ref,
                   out_ref, *, single_out):
    """One batch tile of G2VMOD.forward: g2v_encoder -> flatten -> out head."""
    # ----- g2v_encoder: bf16 MXU matmuls, f32 accumulate, f32 epilogue -----
    x = x_ref[...]                                                   # bf16 [TB, in]
    h = jnp.dot(x, w1_ref[...], preferred_element_type=jnp.float32) + b1_ref[...]
    h = jnp.maximum(h, 0.0)
    h = jnp.dot(h.astype(jnp.bfloat16), w2_ref[...],
                preferred_element_type=jnp.float32) + b2_ref[...]
    h = jnp.maximum(h, 0.0)
    z = jnp.dot(h.astype(jnp.bfloat16), w3_ref[...],
                preferred_element_type=jnp.float32) + b3_ref[...]
    # ----- flatten: no-op for a [TB, embed] activation -----
    # ----- out head -----
    h = jnp.dot(z.astype(jnp.bfloat16), wo1_ref[...],
                preferred_element_type=jnp.float32) + bo1_ref[...]
    h = jnp.maximum(h, 0.0)
    h = jnp.dot(h.astype(jnp.bfloat16), wo2_ref[...],
                preferred_element_type=jnp.float32) + bo2_ref[...]
    h = jnp.maximum(h, 0.0)                                          # f32 [TB, 64]

    if single_out:
        # n_class == 1: an MXU pass would waste >99% of the output lanes.
        # VPU multiply against the lane-major (1, 64) weight row + XLU lane
        # reduction; store a lane-dense (1, TB) block (unmasked vst).
        w_row = wo3_ref[...]                                         # f32 (1, 64)
        logit = jnp.sum(h * w_row, axis=-1)[None, :] + bo3_ref[...]  # f32 (1, TB)
        # Sigmoid: exp and reciprocal both land on the otherwise-idle EUP slot.
        prob = pl.reciprocal(1.0 + jnp.exp(-logit), approx=True)
        out_ref[...] = prob.reshape(out_ref.shape).astype(out_ref.dtype)
    else:
        logit = jnp.dot(h.astype(jnp.bfloat16), wo3_ref[...],
                        preferred_element_type=jnp.float32) + bo3_ref[...]
        out_ref[...] = logit.astype(out_ref.dtype)   # n_class > 2: identity activation


def init_g2vmod_params(key, input_size, embed_size, n_class):
    """Deterministic synthetic parameters (PyTorch Linear shapes, stored transposed
    so the kernel computes x @ W). Kept in f32; the wrapper casts for the MXU."""
    dims_enc = [(input_size, 768), (768, 512), (512, embed_size)]
    dims_out = [(embed_size, 128), (128, 64), (64, n_class)]
    params = []
    for i, (fan_in, fan_out) in enumerate(dims_enc + dims_out):
        kw, kb, key = jax.random.split(jax.random.fold_in(key, i), 3)
        bound = 1.0 / jnp.sqrt(fan_in)
        w = jax.random.uniform(kw, (fan_in, fan_out), jnp.float32, -bound, bound)
        b = jax.random.uniform(kb, (1, fan_out), jnp.float32, -bound, bound)
        params += [w, b]
    return params


def _default_vmem_limit():
    """phys/2, clamped to [32 MiB, 96 MiB]: 64 MiB on v5e/v6e, 32 MiB on v7x."""
    try:
        phys = int(pltpu.get_tpu_info().vmem_capacity_bytes)
    except Exception:  # conservative fallback (treat as v7x-sized VMEM)
        phys = 64 * 1024 * 1024
    return int(max(32 * 1024 * 1024, min(96 * 1024 * 1024, phys // 2)))


def g2vmod_forward(gp, g2v, go, exp, params, *, n_class, block_b=1024):
    """Matches G2VMOD.forward(gp, g2v, go, exp): only g2v is used."""
    del gp, go, exp  # unused by the reference forward
    g2v = g2v.astype(jnp.float32)          # mirrors .float() in the PyTorch module
    B, input_size = g2v.shape

    w1, b1, w2, b2, w3, b3, wo1, bo1, wo2, bo2, wo3, bo3 = params
    embed_size = w3.shape[1]
    single_out = (n_class == 1)

    # --- pad the feature dim of the first (largest-FLOP) matmul to 128 lanes ---
    in_pad = max(128, _round_up(input_size, 128))
    if in_pad != input_size:
        g2v = jnp.pad(g2v, ((0, 0), (0, in_pad - input_size)))
        w1 = jnp.pad(w1, ((0, in_pad - input_size), (0, 0)))   # zero rows: exact

    # --- batch tile: 16-aligned (bf16 sublane pairs); keep >=2 grid steps so the
    #     "parallel" axis can shard across v7x's two TensorCores ---
    b16 = _round_up(B, 16)
    tb = _round_up(max(16, min(block_b, b16)), 16)
    if b16 >= 32:
        tb = min(tb, _round_up(pl.cdiv(b16, 2), 16))
    b_pad = pl.cdiv(B, tb) * tb
    n_steps = b_pad // tb

    x = g2v.astype(jnp.bfloat16)
    if b_pad != B:
        x = jnp.pad(x, ((0, b_pad - B), (0, 0)))

    # bf16 weights (full-rate MXU, half the DMA/VMEM); f32 biases.  Single-output
    # head weight is pre-transposed to a lane-major f32 (1, 64) row.
    w1b, w2b, w3b, wo1b, wo2b = (w.astype(jnp.bfloat16) for w in (w1, w2, w3, wo1, wo2))
    wo3_arg = wo3.T.astype(jnp.float32) if single_out else wo3.astype(jnp.bfloat16)
    param_args = [w1b, b1, w2b, b2, w3b, b3, wo1b, bo1, wo2b, bo2, wo3_arg, bo3]

    def resident(arr):
        # Constant-index block: stays VMEM-resident across grid steps and is
        # single-buffered (no point double-buffering data that never changes).
        return pl.BlockSpec(arr.shape, lambda i: (0, 0),
                            pipeline_mode=pl.Buffered(1))

    in_specs = ([pl.BlockSpec((tb, in_pad), lambda i: (i, 0))]
                + [resident(a) for a in param_args])

    if single_out:
        # Lane-dense output: each grid step writes one unmasked (1, tb) slab.
        out_shape = jax.ShapeDtypeStruct((n_steps, 1, tb), jnp.float32)
        out_specs = pl.BlockSpec((1, 1, tb), lambda i: (i, 0, 0))
    else:
        out_shape = jax.ShapeDtypeStruct((b_pad, n_class), jnp.float32)
        out_specs = pl.BlockSpec((tb, n_class), lambda i: (i, 0))

    flops = 2 * b_pad * (in_pad * 768 + 768 * 512 + 512 * embed_size
                         + embed_size * 128 + 128 * 64 + 64 * n_class)
    bytes_accessed = (sum(int(a.size) * a.dtype.itemsize for a in param_args)
                      + b_pad * in_pad * 2 + b_pad * n_class * 4)
    transcendentals = b_pad * n_class if single_out else 0

    kernel = functools.partial(_g2vmod_kernel, single_out=single_out)

    out = pl.pallas_call(
        kernel,
        out_shape=out_shape,
        grid=(n_steps,),
        in_specs=in_specs,
        out_specs=out_specs,
        compiler_params=pltpu.CompilerParams(
            dimension_semantics=("parallel",),        # shard batch steps across TCs
            vmem_limit_bytes=_default_vmem_limit()),
        cost_estimate=pl.CostEstimate(
            flops=flops,
            transcendentals=transcendentals,
            bytes_accessed=bytes_accessed),
    )(x, *param_args)

    if single_out:
        return out.reshape(b_pad, 1)[:B]
    return out[:B]


def g2vmod_reference(g2v, params, *, n_class):
    """Pure-JAX reference using the same dtype plan (bf16 matmuls, f32 accumulate)."""
    w1, b1, w2, b2, w3, b3, wo1, bo1, wo2, bo2, wo3, bo3 = params

    def mm(x, w):
        return jnp.dot(x.astype(jnp.bfloat16), w.astype(jnp.bfloat16),
                       preferred_element_type=jnp.float32)

    g2v = g2v.astype(jnp.float32)
    h = jnp.maximum(mm(g2v, w1) + b1, 0.0)
    h = jnp.maximum(mm(h, w2) + b2, 0.0)
    z = mm(h, w3) + b3
    h = jnp.maximum(mm(z, wo1) + bo1, 0.0)
    h = jnp.maximum(mm(h, wo2) + bo2, 0.0)
    if n_class == 1:
        logit = h @ wo3 + bo3            # final layer in f32 (matches kernel path)
        return jax.nn.sigmoid(logit)
    return mm(h, wo3) + bo3


if __name__ == "__main__":
    # Small, consistent config:
    #   n_classes=2  -> n_class=1 -> sigmoid activation
    #   embed_size must equal combine_size for forward() to type-check.
    batch = 20
    input_size = 256      # G2VMOD's g2v_encoder input width (overrides 1000)
    embed_size = 128
    combine_size = 128
    n_classes = 2
    n_class = 1 if n_classes <= 2 else n_classes
    assert embed_size == combine_size, "reference forward requires embed_size == combine_size"

    key = jax.random.PRNGKey(0)
    k_gp, k_g2v, k_go, k_exp, k_params = jax.random.split(key, 5)

    # Only g2v matters; the other inputs exist to mirror the forward signature.
    gp = jax.random.normal(k_gp, (batch, 16), jnp.float32)
    g2v = jax.random.normal(k_g2v, (batch, input_size), jnp.float32)
    go = jax.random.normal(k_go, (batch, 32), jnp.float32)
    exp = jax.random.normal(k_exp, (batch, 1343), jnp.float32)

    params = init_g2vmod_params(k_params, input_size, embed_size, n_class)
    ref = g2vmod_reference(g2v, params, n_class=n_class)

    # 1) Default tiling (tile capped at half the padded batch -> 2 grid steps).
    prob = g2vmod_forward(gp, g2v, go, exp, params, n_class=n_class)
    prob = jax.block_until_ready(prob)
    assert prob.shape == (batch, n_class)
    assert jnp.allclose(prob, ref, atol=1e-2, rtol=1e-2), "mismatch vs JAX reference"

    # 2) Explicit small tile to exercise the multi-step grid + batch padding path.
    prob_tiled = g2vmod_forward(gp, g2v, go, exp, params, n_class=n_class, block_b=16)
    prob_tiled = jax.block_until_ready(prob_tiled)
    assert prob_tiled.shape == (batch, n_class)
    assert jnp.allclose(prob_tiled, ref, atol=1e-2, rtol=1e-2), "mismatch (tiled) vs JAX reference"

    print("KERNEL_OK")
</pallas_src>

<mosaic_0001>
module attributes {stable_mosaic.version = 11 : i64} {
  func.func @_g2vmod_kernel(%arg0: i32, %arg1: memref<16x256xbf16, #tpu.memory_space<vmem>>, %arg2: memref<256x768xbf16, #tpu.memory_space<vmem>>, %arg3: memref<1x768xf32, #tpu.memory_space<vmem>>, %arg4: memref<768x512xbf16, #tpu.memory_space<vmem>>, %arg5: memref<1x512xf32, #tpu.memory_space<vmem>>, %arg6: memref<512x128xbf16, #tpu.memory_space<vmem>>, %arg7: memref<1x128xf32, #tpu.memory_space<vmem>>, %arg8: memref<128x128xbf16, #tpu.memory_space<vmem>>, %arg9: memref<1x128xf32, #tpu.memory_space<vmem>>, %arg10: memref<128x64xbf16, #tpu.memory_space<vmem>>, %arg11: memref<1x64xf32, #tpu.memory_space<vmem>>, %arg12: memref<1x64xf32, #tpu.memory_space<vmem>>, %arg13: memref<1x1xf32, #tpu.memory_space<vmem>>, %arg14: memref<1x1x16xf32, #tpu.memory_space<vmem>>) attributes {dimension_semantics = [#tpu.dimension_semantics<parallel>], iteration_bounds = array<i64: 2>, scalar_prefetch = 0 : i64, scratch_operands = 0 : i64, tpu.core_type = #tpu.core_type<tc>, window_params = [{transform_indices = @transform_0, window_bounds = array<i64: 16, 256>}, {pipeline_mode = #tpu.pipeline_mode<synchronous>, transform_indices = @transform_1, window_bounds = array<i64: 256, 768>}, {pipeline_mode = #tpu.pipeline_mode<synchronous>, transform_indices = @transform_2, window_bounds = array<i64: 1, 768>}, {pipeline_mode = #tpu.pipeline_mode<synchronous>, transform_indices = @transform_3, window_bounds = array<i64: 768, 512>}, {pipeline_mode = #tpu.pipeline_mode<synchronous>, transform_indices = @transform_4, window_bounds = array<i64: 1, 512>}, {pipeline_mode = #tpu.pipeline_mode<synchronous>, transform_indices = @transform_5, window_bounds = array<i64: 512, 128>}, {pipeline_mode = #tpu.pipeline_mode<synchronous>, transform_indices = @transform_6, window_bounds = array<i64: 1, 128>}, {pipeline_mode = #tpu.pipeline_mode<synchronous>, transform_indices = @transform_7, window_bounds = array<i64: 128, 128>}, {pipeline_mode = #tpu.pipeline_mode<synchronous>, transform_indices = @transform_8, window_bounds = array<i64: 1, 128>}, {pipeline_mode = #tpu.pipeline_mode<synchronous>, transform_indices = @transform_9, window_bounds = array<i64: 128, 64>}, {pipeline_mode = #tpu.pipeline_mode<synchronous>, transform_indices = @transform_10, window_bounds = array<i64: 1, 64>}, {pipeline_mode = #tpu.pipeline_mode<synchronous>, transform_indices = @transform_11, window_bounds = array<i64: 1, 64>}, {pipeline_mode = #tpu.pipeline_mode<synchronous>, transform_indices = @transform_12, window_bounds = array<i64: 1, 1>}, {transform_indices = @transform_13, window_bounds = array<i64: 1, 1, 16>}]} {
    %c0 = arith.constant 0 : index
    %c0_0 = arith.constant 0 : index
    %0 = vector.load %arg1[%c0, %c0_0] : memref<16x256xbf16, #tpu.memory_space<vmem>>, vector<16x256xbf16>
    %c0_1 = arith.constant 0 : index
    %c0_2 = arith.constant 0 : index
    %1 = vector.load %arg2[%c0_1, %c0_2] : memref<256x768xbf16, #tpu.memory_space<vmem>>, vector<256x768xbf16>
    %cst = arith.constant dense<0.000000e+00> : vector<16x768xf32>
    %2 = tpu.matmul %0, %1, %cst {dimension_numbers = #tpu.dot_dimension_numbers<[1], [0], [0], [1], [0, 0, 1, 1], [], []>} : vector<16x256xbf16>, vector<256x768xbf16>, vector<16x768xf32> -> vector<16x768xf32>
    %c0_3 = arith.constant 0 : index
    %c0_4 = arith.constant 0 : index
    %3 = vector.load %arg3[%c0_3, %c0_4] : memref<1x768xf32, #tpu.memory_space<vmem>>, vector<1x768xf32>
    %4 = vector.broadcast %3 : vector<1x768xf32> to vector<16x768xf32>
    %5 = arith.addf %2, %4 : vector<16x768xf32>
    %cst_5 = arith.constant 0.000000e+00 : f32
    %6 = vector.broadcast %cst_5 : f32 to vector<16x768xf32>
    %7 = arith.maximumf %5, %6 : vector<16x768xf32>
    %8 = arith.truncf %7 : vector<16x768xf32> to vector<16x768xbf16>
    %c0_6 = arith.constant 0 : index
    %c0_7 = arith.constant 0 : index
    %9 = vector.load %arg4[%c0_6, %c0_7] : memref<768x512xbf16, #tpu.memory_space<vmem>>, vector<768x512xbf16>
    %cst_8 = arith.constant dense<0.000000e+00> : vector<16x512xf32>
    %10 = tpu.matmul %8, %9, %cst_8 {dimension_numbers = #tpu.dot_dimension_numbers<[1], [0], [0], [1], [0, 0, 1, 1], [], []>} : vector<16x768xbf16>, vector<768x512xbf16>, vector<16x512xf32> -> vector<16x512xf32>
    %c0_9 = arith.constant 0 : index
    %c0_10 = arith.constant 0 : index
    %11 = vector.load %arg5[%c0_9, %c0_10] : memref<1x512xf32, #tpu.memory_space<vmem>>, vector<1x512xf32>
    %12 = vector.broadcast %11 : vector<1x512xf32> to vector<16x512xf32>
    %13 = arith.addf %10, %12 : vector<16x512xf32>
    %cst_11 = arith.constant 0.000000e+00 : f32
    %14 = vector.broadcast %cst_11 : f32 to vector<16x512xf32>
    %15 = arith.maximumf %13, %14 : vector<16x512xf32>
    %16 = arith.truncf %15 : vector<16x512xf32> to vector<16x512xbf16>
    %c0_12 = arith.constant 0 : index
    %c0_13 = arith.constant 0 : index
    %17 = vector.load %arg6[%c0_12, %c0_13] : memref<512x128xbf16, #tpu.memory_space<vmem>>, vector<512x128xbf16>
    %cst_14 = arith.constant dense<0.000000e+00> : vector<16x128xf32>
    %18 = tpu.matmul %16, %17, %cst_14 {dimension_numbers = #tpu.dot_dimension_numbers<[1], [0], [0], [1], [0, 0, 1, 1], [], []>} : vector<16x512xbf16>, vector<512x128xbf16>, vector<16x128xf32> -> vector<16x128xf32>
    %c0_15 = arith.constant 0 : index
    %c0_16 = arith.constant 0 : index
    %19 = vector.load %arg7[%c0_15, %c0_16] : memref<1x128xf32, #tpu.memory_space<vmem>>, vector<1x128xf32>
    %20 = vector.broadcast %19 : vector<1x128xf32> to vector<16x128xf32>
    %21 = arith.addf %18, %20 : vector<16x128xf32>
    %22 = arith.truncf %21 : vector<16x128xf32> to vector<16x128xbf16>
    %c0_17 = arith.constant 0 : index
    %c0_18 = arith.constant 0 : index
    %23 = vector.load %arg8[%c0_17, %c0_18] : memref<128x128xbf16, #tpu.memory_space<vmem>>, vector<128x128xbf16>
    %cst_19 = arith.constant dense<0.000000e+00> : vector<16x128xf32>
    %24 = tpu.matmul %22, %23, %cst_19 {dimension_numbers = #tpu.dot_dimension_numbers<[1], [0], [0], [1], [0, 0, 1, 1], [], []>} : vector<16x128xbf16>, vector<128x128xbf16>, vector<16x128xf32> -> vector<16x128xf32>
    %c0_20 = arith.constant 0 : index
    %c0_21 = arith.constant 0 : index
    %25 = vector.load %arg9[%c0_20, %c0_21] : memref<1x128xf32, #tpu.memory_space<vmem>>, vector<1x128xf32>
    %26 = vector.broadcast %25 : vector<1x128xf32> to vector<16x128xf32>
    %27 = arith.addf %24, %26 : vector<16x128xf32>
    %cst_22 = arith.constant 0.000000e+00 : f32
    %28 = vector.broadcast %cst_22 : f32 to vector<16x128xf32>
    %29 = arith.maximumf %27, %28 : vector<16x128xf32>
    %30 = arith.truncf %29 : vector<16x128xf32> to vector<16x128xbf16>
    %c0_23 = arith.constant 0 : index
    %c0_24 = arith.constant 0 : index
    %31 = vector.load %arg10[%c0_23, %c0_24] : memref<128x64xbf16, #tpu.memory_space<vmem>>, vector<128x64xbf16>
    %cst_25 = arith.constant dense<0.000000e+00> : vector<16x64xf32>
    %32 = tpu.matmul %30, %31, %cst_25 {dimension_numbers = #tpu.dot_dimension_numbers<[1], [0], [0], [1], [0, 0, 1, 1], [], []>} : vector<16x128xbf16>, vector<128x64xbf16>, vector<16x64xf32> -> vector<16x64xf32>
    %c0_26 = arith.constant 0 : index
    %c0_27 = arith.constant 0 : index
    %33 = vector.load %arg11[%c0_26, %c0_27] : memref<1x64xf32, #tpu.memory_space<vmem>>, vector<1x64xf32>
    %34 = vector.broadcast %33 : vector<1x64xf32> to vector<16x64xf32>
    %35 = arith.addf %32, %34 : vector<16x64xf32>
    %cst_28 = arith.constant 0.000000e+00 : f32
    %36 = vector.broadcast %cst_28 : f32 to vector<16x64xf32>
    %37 = arith.maximumf %35, %36 : vector<16x64xf32>
    %c0_29 = arith.constant 0 : index
    %c0_30 = arith.constant 0 : index
    %38 = vector.load %arg12[%c0_29, %c0_30] : memref<1x64xf32, #tpu.memory_space<vmem>>, vector<1x64xf32>
    %39 = vector.broadcast %38 : vector<1x64xf32> to vector<16x64xf32>
    %40 = arith.mulf %37, %39 : vector<16x64xf32>
    %cst_31 = arith.constant dense<0.000000e+00> : vector<16xf32>
    %41 = vector.multi_reduction <add>, %40, %cst_31 [1] : vector<16x64xf32> to vector<16xf32>
    %42 = vector.shape_cast %41 : vector<16xf32> to vector<1x16xf32>
    %c0_32 = arith.constant 0 : index
    %c0_33 = arith.constant 0 : index
    %43 = vector.load %arg13[%c0_32, %c0_33] : memref<1x1xf32, #tpu.memory_space<vmem>>, vector<1x1xf32>
    %44 = vector.broadcast %43 : vector<1x1xf32> to vector<1x16xf32>
    %45 = arith.addf %42, %44 : vector<1x16xf32>
    %cst_34 = arith.constant 0.000000e+00 : f32
    %46 = vector.broadcast %cst_34 : f32 to vector<1x16xf32>
    %47 = arith.subf %46, %45 : vector<1x16xf32>
    %48 = math.exp %47 : vector<1x16xf32>
    %cst_35 = arith.constant 1.000000e+00 : f32
    %49 = vector.broadcast %cst_35 : f32 to vector<1x16xf32>
    %50 = arith.addf %49, %48 : vector<1x16xf32>
    %51 = tpu.reciprocal %50 {approx = true} : vector<1x16xf32> -> vector<1x16xf32>
    %52 = vector.shape_cast %51 : vector<1x16xf32> to vector<1x1x16xf32>
    %c0_36 = arith.constant 0 : index
    %c0_37 = arith.constant 0 : index
    %c0_38 = arith.constant 0 : index
    %53 = vector.load %arg14[%c0_36, %c0_37, %c0_38] : memref<1x1x16xf32, #tpu.memory_space<vmem>>, vector<1x1x16xf32>
    tpu.vector_store %arg14[%c0_36, %c0_37, %c0_38], %52 {strides = array<i32>} : memref<1x1x16xf32, #tpu.memory_space<vmem>>, vector<1x1x16xf32>,
    return
  }
  func.func @transform_0(%arg0: i32) -> (i32, i32) {
    %c0_i32 = arith.constant 0 : i32
    %c0_i32_0 = arith.constant 0 : i32
    return %arg0, %c0_i32 : i32, i32
  }
  func.func @transform_1(%arg0: i32) -> (i32, i32) {
    %c0_i32 = arith.constant 0 : i32
    %c0_i32_0 = arith.constant 0 : i32
    %c0_i32_1 = arith.constant 0 : i32
    return %c0_i32, %c0_i32_0 : i32, i32
  }
  func.func @transform_2(%arg0: i32) -> (i32, i32) {
    %c0_i32 = arith.constant 0 : i32
    %c0_i32_0 = arith.constant 0 : i32
    %c0_i32_1 = arith.constant 0 : i32
    return %c0_i32, %c0_i32_0 : i32, i32
  }
  func.func @transform_3(%arg0: i32) -> (i32, i32) {
    %c0_i32 = arith.constant 0 : i32
    %c0_i32_0 = arith.constant 0 : i32
    %c0_i32_1 = arith.constant 0 : i32
    return %c0_i32, %c0_i32_0 : i32, i32
  }
  func.func @transform_4(%arg0: i32) -> (i32, i32) {
    %c0_i32 = arith.constant 0 : i32
    %c0_i32_0 = arith.constant 0 : i32
    %c0_i32_1 = arith.constant 0 : i32
    return %c0_i32, %c0_i32_0 : i32, i32
  }
  func.func @transform_5(%arg0: i32) -> (i32, i32) {
    %c0_i32 = arith.constant 0 : i32
    %c0_i32_0 = arith.constant 0 : i32
    %c0_i32_1 = arith.constant 0 : i32
    return %c0_i32, %c0_i32_0 : i32, i32
  }
  func.func @transform_6(%arg0: i32) -> (i32, i32) {
    %c0_i32 = arith.constant 0 : i32
    %c0_i32_0 = arith.constant 0 : i32
    %c0_i32_1 = arith.constant 0 : i32
    return %c0_i32, %c0_i32_0 : i32, i32
  }
  func.func @transform_7(%arg0: i32) -> (i32, i32) {
    %c0_i32 = arith.constant 0 : i32
    %c0_i32_0 = arith.constant 0 : i32
    %c0_i32_1 = arith.constant 0 : i32
    return %c0_i32, %c0_i32_0 : i32, i32
  }
  func.func @transform_8(%arg0: i32) -> (i32, i32) {
    %c0_i32 = arith.constant 0 : i32
    %c0_i32_0 = arith.constant 0 : i32
    %c0_i32_1 = arith.constant 0 : i32
    return %c0_i32, %c0_i32_0 : i32, i32
  }
  func.func @transform_9(%arg0: i32) -> (i32, i32) {
    %c0_i32 = arith.constant 0 : i32
    %c0_i32_0 = arith.constant 0 : i32
    %c0_i32_1 = arith.constant 0 : i32
    return %c0_i32, %c0_i32_0 : i32, i32
  }
  func.func @transform_10(%arg0: i32) -> (i32, i32) {
    %c0_i32 = arith.constant 0 : i32
    %c0_i32_0 = arith.constant 0 : i32
    %c0_i32_1 = arith.constant 0 : i32
    return %c0_i32, %c0_i32_0 : i32, i32
  }
  func.func @transform_11(%arg0: i32) -> (i32, i32) {
    %c0_i32 = arith.constant 0 : i32
    %c0_i32_0 = arith.constant 0 : i32
    %c0_i32_1 = arith.constant 0 : i32
    return %c0_i32, %c0_i32_0 : i32, i32
  }
  func.func @transform_12(%arg0: i32) -> (i32, i32) {
    %c0_i32 = arith.constant 0 : i32
    %c0_i32_0 = arith.constant 0 : i32
    %c0_i32_1 = arith.constant 0 : i32
    return %c0_i32, %c0_i32_0 : i32, i32
  }
  func.func @transform_13(%arg0: i32) -> (i32, i32, i32) {
    %c0_i32 = arith.constant 0 : i32
    %c0_i32_0 = arith.constant 0 : i32
    %c0_i32_1 = arith.constant 0 : i32
    return %arg0, %c0_i32, %c0_i32_0 : i32, i32, i32
  }
}

</mosaic_0001>

<llo_original>
// kernel: tpu_custom_call.1
$region0: #{tpu_custom_call.1}
  #allocation0 [shape = 'u32[]', space=smem, size = 0x4, offset = 0x4, fixed_abs, tag = 'smem constant byte address 0x4 - core index']
  #allocation1 [shape = 'u32[72,128]{1,0:T(1,128)}', space=vmem, size = 0x9000, scoped, tag = 'internal scratch']
  #allocation2 [shape = 'f32[1,1]{1,0:T(1,128)S(1)}', space=vmem, size = 0x200, scoped, tag = 'scoped memory for tpu_custom_call.1']
  %s0 = inlined_call_operand.vmem [shape: bf16[32,256], index: 0, kind: input, shape index: {}]
  %s1 = inlined_call_operand.hbm [shape: bf16[256,768], index: 1, kind: input, shape index: {}]
  %s2 = inlined_call_operand.vmem [shape: f32[1,768], index: 2, kind: input, shape index: {}]
  %s3 = inlined_call_operand.hbm [shape: bf16[768,512], index: 3, kind: input, shape index: {}]
  %s4 = inlined_call_operand.hbm [shape: f32[1,512], index: 4, kind: input, shape index: {}]
  %s5 = inlined_call_operand.hbm [shape: bf16[512,128], index: 5, kind: input, shape index: {}]
  %s6 = inlined_call_operand.vmem [shape: f32[1,128], index: 6, kind: input, shape index: {}]
  %s7 = inlined_call_operand.vmem [shape: bf16[128,128], index: 7, kind: input, shape index: {}]
  %s8 = inlined_call_operand.vmem [shape: f32[1,128], index: 8, kind: input, shape index: {}]
  %s9 = inlined_call_operand.vmem [shape: bf16[128,64], index: 9, kind: input, shape index: {}]
  %s10 = inlined_call_operand.vmem [shape: f32[1,64], index: 10, kind: input, shape index: {}]
  %s11 = inlined_call_operand.vmem [shape: f32[1,64], index: 11, kind: input, shape index: {}]
  %s12 = inlined_call_operand.<no memory space> [shape: f32[1,1], index: 12, kind: input, shape index: {}]
  %s13 = inlined_call_operand.hbm [shape: f32[2,1,16], index: 13, kind: output, shape index: {}]
  %s14 = sld [smem:[#allocation0]]
  $region101: #{tpu_custom_call.1} parent=0
    _
  %s16 = ssub.s32 1, %s14
  %s17 = scalar_select 0, %s16, %s14
  %v18 = vstv %s12
  %19 = vst [vmem:[#allocation2] sm:$0x1] %v18
  $region1: #{tpu_custom_call.1} parent=0
    #allocation3 [shape = 'u8[393216]{0}', space=vmem, size = 0x60000, scoped, tag = 'input window, operand 1, single buffered']
    #allocation4 [shape = 's32[2]{0}', space=sflag, size = 0x8, scoped, tag = 'scoped memory for tpu_custom_call.1']
    #allocation5 [shape = 's32[2]{0}', space=sflag, size = 0x8, scoped, tag = 'scoped memory for tpu_custom_call.1']
    #allocation6 [shape = 'u8[786432]{0}', space=vmem, size = 0xc0000, scoped, tag = 'input window, operand 3, single buffered']
    #allocation7 [shape = 's32[1]{0}', space=sflag, size = 0x4, scoped, tag = 'scoped memory for tpu_custom_call.1']
    #allocation8 [shape = 'u8[2048]{0}', space=vmem, size = 0x800, scoped, tag = 'input window, operand 4, single buffered']
    #allocation9 [shape = 'u8[131072]{0}', space=vmem, size = 0x20000, scoped, tag = 'input window, operand 5, single buffered']
    #allocation10 [shape = 's32[1]{0}', space=sflag, size = 0x4, scoped, tag = 'scoped memory for tpu_custom_call.1']
    #allocation11 [shape = 'u8[1024]{0}', space=vmem, size = 0x400, scoped, tag = 'output window, operand 0']
    %20 = vsyncpa [#allocation4], 0
    %21 = vsyncpa [#allocation7], 0
    %22 = vsyncpa [#allocation10], 0
    %23 = vsyncpa [#allocation5], 0
    %s24 = scalar_lea.sflag [#allocation5], 1
    %25 = vsyncpa %s24, 0
    loop: start=0, step=1, limit=4
    $region2: #{tpu_custom_call.1} parent=1 // loop_pre_header
      _
    $region3: #{tpu_custom_call.1} parent=1 // loop_header
      %s27 = sphi 0, %s31
      %p28 = scmp.ge.s32.totalorder %s27, 4
      %s37 = sphi 0, %s39
      %s40 = sphi 0, %s37
      %s41 = sphi 0, %s40
      %s57 = sphi 0, %s41
      %s61 = sphi 0, %s61
      %s63 = sphi 0, %s61
      %s64 = sphi 0, %s63
      %s78 = sphi 0, %s64
      %s82 = sphi 0, %s82
      %s84 = sphi 0, %s82
      %s85 = sphi 0, %s84
      %s99 = sphi 0, %s85
      %s103 = sphi 0, %s103
      %s105 = sphi 0, %s103
      %s106 = sphi 0, %s105
      %s120 = sphi 0, %s106
      %s124 = sphi 0, %s124
      %s126 = sphi 0, %s124
      %s127 = sphi 0, %s126
      %s141 = sphi 0, %s127
      %s145 = sphi 0, %s145
      %s147 = sphi 0, %s145
      %s148 = sphi 0, %s147
      %s162 = sphi 0, %s148
      %s166 = sphi 0, %s166
      %s168 = sphi 0, %s166
      %s169 = sphi 0, %s168
      %s183 = sphi 0, %s169
      %s187 = sphi 0, %s187
      %s189 = sphi 0, %s187
      %s190 = sphi 0, %s189
      %s204 = sphi 0, %s190
      %s208 = sphi 0, %s208
      %s210 = sphi 0, %s208
      %s211 = sphi 0, %s210
      %s225 = sphi 0, %s211
      %s229 = sphi 0, %s229
      %s231 = sphi 0, %s229
      %s232 = sphi 0, %s231
      %s246 = sphi 0, %s232
      %s250 = sphi 0, %s250
      %s252 = sphi 0, %s250
      %s253 = sphi 0, %s252
      %s267 = sphi 0, %s253
      %s271 = sphi 0, %s271
      %s273 = sphi 0, %s271
      %s274 = sphi 0, %s273
      %s288 = sphi 0, %s274
      %s292 = sphi 0, %s292
      %s294 = sphi 0, %s292
      %s295 = sphi 0, %s294
      %s309 = sphi 0, %s295
      %s315 = sphi 0, %s317
      %s318 = sphi 0, %s315
      %s319 = sphi 0, %s318
      %s335 = sphi 0, %s319
    $region4: #{tpu_custom_call.1} parent=1 // loop_header_branch
      %30 = sbr.rel (%p28) target = $region8
    $region5: #{tpu_custom_call.1} parent=1 // loop_body
      %s32 = ssub.s32 %s27, 1
      %s33 = ssub.s32 %s27, 2
      %s34 = sadd.s32 %s27, 1
      %s35 = ssub.s32 %s27, %s34
      %p36 = scmp.eq.s32.totalorder %s35, 0
      %s38 = sadd.s32 %s37, 1
      %s39 = scalar_select %p36, %s37, %s38
      %p42 = pneg %p36
      %p43 = scmp.eq.s32.totalorder %s27, 1
      %p44 = por %p42, %p43
      %p45 = scmp.ne.s32.totalorder %s37, %s40
      %p46 = scmp.eq.s32.totalorder %s27, 0
      %p47 = por %p45, %p46
      %p48 = scmp.ne.s32.totalorder %s37, %s40
      %p49 = scmp.eq.s32.totalorder %s32, 1
      %p50 = por %p48, %p49
      %p51 = scmp.ne.s32.totalorder %s40, %s41
      %p52 = scmp.eq.s32.totalorder %s32, 0
      %p53 = por %p51, %p52
      %p54 = scmp.ne.s32.totalorder %s40, %s41
      %p55 = scmp.eq.s32.totalorder %s33, 1
      %p56 = por %p54, %p55
      %p58 = scmp.ne.s32.totalorder %s41, %s57
      %p59 = scmp.eq.s32.totalorder %s33, 0
      %p60 = por %p58, %p59
      %s62 = sadd.s32 %s61, 1
      %p65 = scmp.eq.s32.totalorder %s27, 1
      %p66 = scmp.ne.s32.totalorder %s61, %s63
      %p67 = scmp.eq.s32.totalorder %s27, 0
      %p68 = por %p66, %p67
      %p69 = scmp.ne.s32.totalorder %s61, %s63
      %p70 = scmp.eq.s32.totalorder %s32, 1
      %p71 = por %p69, %p70
      %p72 = scmp.ne.s32.totalorder %s63, %s64
      %p73 = scmp.eq.s32.totalorder %s32, 0
      %p74 = por %p72, %p73
      %p75 = scmp.ne.s32.totalorder %s63, %s64
      %p76 = scmp.eq.s32.totalorder %s33, 1
      %p77 = por %p75, %p76
      %p79 = scmp.ne.s32.totalorder %s64, %s78
      %p80 = scmp.eq.s32.totalorder %s33, 0
      %p81 = por %p79, %p80
      %s83 = sadd.s32 %s82, 1
      %p86 = scmp.eq.s32.totalorder %s27, 1
      %p87 = scmp.ne.s32.totalorder %s82, %s84
      %p88 = scmp.eq.s32.totalorder %s27, 0
      %p89 = por %p87, %p88
      %p90 = scmp.ne.s32.totalorder %s82, %s84
      %p91 = scmp.eq.s32.totalorder %s32, 1
      %p92 = por %p90, %p91
      %p93 = scmp.ne.s32.totalorder %s84, %s85
      %p94 = scmp.eq.s32.totalorder %s32, 0
      %p95 = por %p93, %p94
      %p96 = scmp.ne.s32.totalorder %s84, %s85
      %p97 = scmp.eq.s32.totalorder %s33, 1
      %p98 = por %p96, %p97
      %p100 = scmp.ne.s32.totalorder %s85, %s99
      %p101 = scmp.eq.s32.totalorder %s33, 0
      %p102 = por %p100, %p101
      %s104 = sadd.s32 %s103, 1
      %p107 = scmp.eq.s32.totalorder %s27, 1
      %p108 = scmp.ne.s32.totalorder %s103, %s105
      %p109 = scmp.eq.s32.totalorder %s27, 0
      %p110 = por %p108, %p109
      %p111 = scmp.ne.s32.totalorder %s103, %s105
      %p112 = scmp.eq.s32.totalorder %s32, 1
      %p113 = por %p111, %p112
      %p114 = scmp.ne.s32.totalorder %s105, %s106
      %p115 = scmp.eq.s32.totalorder %s32, 0
      %p116 = por %p114, %p115
      %p117 = scmp.ne.s32.totalorder %s105, %s106
      %p118 = scmp.eq.s32.totalorder %s33, 1
      %p119 = por %p117, %p118
      %p121 = scmp.ne.s32.totalorder %s106, %s120
      %p122 = scmp.eq.s32.totalorder %s33, 0
      %p123 = por %p121, %p122
      %s125 = sadd.s32 %s124, 1
      %p128 = scmp.eq.s32.totalorder %s27, 1
      %p129 = scmp.ne.s32.totalorder %s124, %s126
      %p130 = scmp.eq.s32.totalorder %s27, 0
      %p131 = por %p129, %p130
      %p132 = scmp.ne.s32.totalorder %s124, %s126
      %p133 = scmp.eq.s32.totalorder %s32, 1
      %p134 = por %p132, %p133
      %p135 = scmp.ne.s32.totalorder %s126, %s127
      %p136 = scmp.eq.s32.totalorder %s32, 0
      %p137 = por %p135, %p136
      %p138 = scmp.ne.s32.totalorder %s126, %s127
      %p139 = scmp.eq.s32.totalorder %s33, 1
      %p140 = por %p138, %p139
      %p142 = scmp.ne.s32.totalorder %s127, %s141
      %p143 = scmp.eq.s32.totalorder %s33, 0
      %p144 = por %p142, %p143
      %s146 = sadd.s32 %s145, 1
      %p149 = scmp.eq.s32.totalorder %s27, 1
      %p150 = scmp.ne.s32.totalorder %s145, %s147
      %p151 = scmp.eq.s32.totalorder %s27, 0
      %p152 = por %p150, %p151
      %p153 = scmp.ne.s32.totalorder %s145, %s147
      %p154 = scmp.eq.s32.totalorder %s32, 1
      %p155 = por %p153, %p154
      %p156 = scmp.ne.s32.totalorder %s147, %s148
      %p157 = scmp.eq.s32.totalorder %s32, 0
      %p158 = por %p156, %p157
      %p159 = scmp.ne.s32.totalorder %s147, %s148
      %p160 = scmp.eq.s32.totalorder %s33, 1
      %p161 = por %p159, %p160
      %p163 = scmp.ne.s32.totalorder %s148, %s162
      %p164 = scmp.eq.s32.totalorder %s33, 0
      %p165 = por %p163, %p164
      %s167 = sadd.s32 %s166, 1
      %p170 = scmp.eq.s32.totalorder %s27, 1
      %p171 = scmp.ne.s32.totalorder %s166, %s168
      %p172 = scmp.eq.s32.totalorder %s27, 0
      %p173 = por %p171, %p172
      %p174 = scmp.ne.s32.totalorder %s166, %s168
      %p175 = scmp.eq.s32.totalorder %s32, 1
      %p176 = por %p174, %p175
      %p177 = scmp.ne.s32.totalorder %s168, %s169
      %p178 = scmp.eq.s32.totalorder %s32, 0
      %p179 = por %p177, %p178
      %p180 = scmp.ne.s32.totalorder %s168, %s169
      %p181 = scmp.eq.s32.totalorder %s33, 1
      %p182 = por %p180, %p181
      %p184 = scmp.ne.s32.totalorder %s169, %s183
      %p185 = scmp.eq.s32.totalorder %s33, 0
      %p186 = por %p184, %p185
      %s188 = sadd.s32 %s187, 1
      %p191 = scmp.eq.s32.totalorder %s27, 1
      %p192 = scmp.ne.s32.totalorder %s187, %s189
      %p193 = scmp.eq.s32.totalorder %s27, 0
      %p194 = por %p192, %p193
      %p195 = scmp.ne.s32.totalorder %s187, %s189
      %p196 = scmp.eq.s32.totalorder %s32, 1
      %p197 = por %p195, %p196
      %p198 = scmp.ne.s32.totalorder %s189, %s190
      %p199 = scmp.eq.s32.totalorder %s32, 0
      %p200 = por %p198, %p199
      %p201 = scmp.ne.s32.totalorder %s189, %s190
      %p202 = scmp.eq.s32.totalorder %s33, 1
      %p203 = por %p201, %p202
      %p205 = scmp.ne.s32.totalorder %s190, %s204
      %p206 = scmp.eq.s32.totalorder %s33, 0
      %p207 = por %p205, %p206
      %s209 = sadd.s32 %s208, 1
      %p212 = scmp.eq.s32.totalorder %s27, 1
      %p213 = scmp.ne.s32.totalorder %s208, %s210
      %p214 = scmp.eq.s32.totalorder %s27, 0
      %p215 = por %p213, %p214
      %p216 = scmp.ne.s32.totalorder %s208, %s210
      %p217 = scmp.eq.s32.totalorder %s32, 1
      %p218 = por %p216, %p217
      %p219 = scmp.ne.s32.totalorder %s210, %s211
      %p220 = scmp.eq.s32.totalorder %s32, 0
      %p221 = por %p219, %p220
      %p222 = scmp.ne.s32.totalorder %s210, %s211
      %p223 = scmp.eq.s32.totalorder %s33, 1
      %p224 = por %p222, %p223
      %p226 = scmp.ne.s32.totalorder %s211, %s225
      %p227 = scmp.eq.s32.totalorder %s33, 0
      %p228 = por %p226, %p227
      %s230 = sadd.s32 %s229, 1
      %p233 = scmp.eq.s32.totalorder %s27, 1
      %p234 = scmp.ne.s32.totalorder %s229, %s231
      %p235 = scmp.eq.s32.totalorder %s27, 0
      %p236 = por %p234, %p235
      %p237 = scmp.ne.s32.totalorder %s229, %s231
      %p238 = scmp.eq.s32.totalorder %s32, 1
      %p239 = por %p237, %p238
      %p240 = scmp.ne.s32.totalorder %s231, %s232
      %p241 = scmp.eq.s32.totalorder %s32, 0
      %p242 = por %p240, %p241
      %p243 = scmp.ne.s32.totalorder %s231, %s232
      %p244 = scmp.eq.s32.totalorder %s33, 1
      %p245 = por %p243, %p244
      %p247 = scmp.ne.s32.totalorder %s232, %s246
      %p248 = scmp.eq.s32.totalorder %s33, 0
      %p249 = por %p247, %p248
      %s251 = sadd.s32 %s250, 1
      %p254 = scmp.eq.s32.totalorder %s27, 1
      %p255 = scmp.ne.s32.totalorder %s250, %s252
      %p256 = scmp.eq.s32.totalorder %s27, 0
      %p257 = por %p255, %p256
      %p258 = scmp.ne.s32.totalorder %s250, %s252
      %p259 = scmp.eq.s32.totalorder %s32, 1
      %p260 = por %p258, %p259
      %p261 = scmp.ne.s32.totalorder %s252, %s253
      %p262 = scmp.eq.s32.totalorder %s32, 0
      %p263 = por %p261, %p262
      %p264 = scmp.ne.s32.totalorder %s252, %s253
      %p265 = scmp.eq.s32.totalorder %s33, 1
      %p266 = por %p264, %p265
      %p268 = scmp.ne.s32.totalorder %s253, %s267
      %p269 = scmp.eq.s32.totalorder %s33, 0
      %p270 = por %p268, %p269
      %s272 = sadd.s32 %s271, 1
      %p275 = scmp.eq.s32.totalorder %s27, 1
      %p276 = scmp.ne.s32.totalorder %s271, %s273
      %p277 = scmp.eq.s32.totalorder %s27, 0
      %p278 = por %p276, %p277
      %p279 = scmp.ne.s32.totalorder %s271, %s273
      %p280 = scmp.eq.s32.totalorder %s32, 1
      %p281 = por %p279, %p280
      %p282 = scmp.ne.s32.totalorder %s273, %s274
      %p283 = scmp.eq.s32.totalorder %s32, 0
      %p284 = por %p282, %p283
      %p285 = scmp.ne.s32.totalorder %s273, %s274
      %p286 = scmp.eq.s32.totalorder %s33, 1
      %p287 = por %p285, %p286
      %p289 = scmp.ne.s32.totalorder %s274, %s288
      %p290 = scmp.eq.s32.totalorder %s33, 0
      %p291 = por %p289, %p290
      %s293 = sadd.s32 %s292, 1
      %p296 = scmp.eq.s32.totalorder %s27, 1
      %p297 = scmp.ne.s32.totalorder %s292, %s294
      %p298 = scmp.eq.s32.totalorder %s27, 0
      %p299 = por %p297, %p298
      %p300 = scmp.ne.s32.totalorder %s292, %s294
      %p301 = scmp.eq.s32.totalorder %s32, 1
      %p302 = por %p300, %p301
      %p303 = scmp.ne.s32.totalorder %s294, %s295
      %p304 = scmp.eq.s32.totalorder %s32, 0
      %p305 = por %p303, %p304
      %p306 = scmp.ne.s32.totalorder %s294, %s295
      %p307 = scmp.eq.s32.totalorder %s33, 1
      %p308 = por %p306, %p307
      %p310 = scmp.ne.s32.totalorder %s295, %s309
      %p311 = scmp.eq.s32.totalorder %s33, 0
      %p312 = por %p310, %p311
      %s313 = ssub.s32 %s27, %s34
      %p314 = scmp.eq.s32.totalorder %s313, 0
      %s316 = sadd.s32 %s315, 1
      %s317 = scalar_select %p314, %s315, %s316
      %p320 = pneg %p314
      %p321 = scmp.eq.s32.totalorder %s27, 1
      %p322 = por %p320, %p321
      %p323 = scmp.ne.s32.totalorder %s315, %s318
      %p324 = scmp.eq.s32.totalorder %s27, 0
      %p325 = por %p323, %p324
      %p326 = scmp.ne.s32.totalorder %s315, %s318
      %p327 = scmp.eq.s32.totalorder %s32, 1
      %p328 = por %p326, %p327
      %p329 = scmp.ne.s32.totalorder %s318, %s319
      %p330 = scmp.eq.s32.totalorder %s32, 0
      %p331 = por %p329, %p330
      %p332 = scmp.ne.s32.totalorder %s318, %s319
      %p333 = scmp.eq.s32.totalorder %s33, 1
      %p334 = por %p332, %p333
      %p336 = scmp.ne.s32.totalorder %s319, %s335
      %p337 = scmp.eq.s32.totalorder %s33, 0
      %p338 = por %p336, %p337
      %p339 = scmp.le.s32.totalorder 1, %s27
      %p340 = scmp.lt.s32.totalorder %s27, 3
      %p341 = pnand %p339, %p340
      %p342 = pneg %p341
      // Predicated region
      $region9: #{tpu_custom_call.1} parent=5 // pred_check
        _
      $region10: #{tpu_custom_call.1} parent=5 // pred_check_branch
        %344 = sbr.rel (%p341) target = $region12
      $region11: #{tpu_custom_call.1} parent=5 // pred_region
        %s345 = ssub.s32 %s27, 1
        // Predicated region
        $region13: #{tpu_custom_call.1} parent=11 // pred_check
          %p346 = pneg %p74
        $region14: #{tpu_custom_call.1} parent=11 // pred_check_branch
          %348 = sbr.rel (%p346) target = $region16
        $region15: #{tpu_custom_call.1} parent=11 // pred_region
          %350 = vsyncadd [#allocation4], 0
          %s351 = sshll.u32 %s1, 4
          %s352 = int_to_ptr.hbm [resolvable:$true] %s351
          %s353 = sshll.u32 [#allocation3], 4
          %s354 = int_to_ptr.vmem [resolvable:$true] %s353
          %359 = dma.hbm_to_vmem [thread:$0]  %s352, 12288, %s354, [#allocation4], 384, 384, 24
        $region16: #{tpu_custom_call.1} parent=11 // pred_fallthru
          _
        // Predicated region
        $region17: #{tpu_custom_call.1} parent=11 // pred_check
          %p360 = pneg %p95
        $region18: #{tpu_custom_call.1} parent=11 // pred_check_branch
          %362 = sbr.rel (%p360) target = $region20
        $region19: #{tpu_custom_call.1} parent=11 // pred_region
          _
        $region20: #{tpu_custom_call.1} parent=11 // pred_fallthru
          _
        // Predicated region
        $region21: #{tpu_custom_call.1} parent=11 // pred_check
          %p363 = pneg %p116
        $region22: #{tpu_custom_call.1} parent=11 // pred_check_branch
          %365 = sbr.rel (%p363) target = $region24
        $region23: #{tpu_custom_call.1} parent=11 // pred_region
          %367 = vsyncadd [#allocation7], 0
          %s368 = sshll.u32 %s3, 4
          %s369 = int_to_ptr.hbm [resolvable:$true] %s368
          %s370 = sshll.u32 [#allocation6], 4
          %s371 = int_to_ptr.vmem [resolvable:$true] %s370
          %376 = dma.hbm_to_vmem [thread:$0]  %s369, 24576, %s371, [#allocation7], 256, 256, 16
        $region24: #{tpu_custom_call.1} parent=11 // pred_fallthru
          _
        // Predicated region
        $region25: #{tpu_custom_call.1} parent=11 // pred_check
          %p377 = pneg %p137
        $region26: #{tpu_custom_call.1} parent=11 // pred_check_branch
          %379 = sbr.rel (%p377) target = $region28
        $region27: #{tpu_custom_call.1} parent=11 // pred_region
          %381 = vsyncadd [#allocation7], 0
          %s383 = sshll.u32 %s4, 4
          %s384 = int_to_ptr.hbm [resolvable:$true] %s383
          %s385 = sshll.u32 [#allocation8], 4
          %s386 = int_to_ptr.vmem [resolvable:$true] %s385
          %388 = dma.hbm_to_vmem [thread:$0]  %s384, 64, %s386, [#allocation7]
        $region28: #{tpu_custom_call.1} parent=11 // pred_fallthru
          _
        // Predicated region
        $region29: #{tpu_custom_call.1} parent=11 // pred_check
          %p389 = pneg %p158
        $region30: #{tpu_custom_call.1} parent=11 // pred_check_branch
          %391 = sbr.rel (%p389) target = $region32
        $region31: #{tpu_custom_call.1} parent=11 // pred_region
          %393 = vsyncadd [#allocation10], 0
          %s394 = sshll.u32 %s5, 4
          %s395 = int_to_ptr.hbm [resolvable:$true] %s394
          %s396 = sshll.u32 [#allocation9], 4
          %s397 = int_to_ptr.vmem [resolvable:$true] %s396
          %402 = dma.hbm_to_vmem [thread:$0]  %s395, 4096, %s397, [#allocation10], 64, 64, 4
        $region32: #{tpu_custom_call.1} parent=11 // pred_fallthru
          _
        // Predicated region
        $region33: #{tpu_custom_call.1} parent=11 // pred_check
          %p403 = pneg %p179
        $region34: #{tpu_custom_call.1} parent=11 // pred_check_branch
          %405 = sbr.rel (%p403) target = $region36
        $region35: #{tpu_custom_call.1} parent=11 // pred_region
          _
        $region36: #{tpu_custom_call.1} parent=11 // pred_fallthru
          _
        // Predicated region
        $region37: #{tpu_custom_call.1} parent=11 // pred_check
          %p406 = pneg %p200
        $region38: #{tpu_custom_call.1} parent=11 // pred_check_branch
          %408 = sbr.rel (%p406) target = $region40
        $region39: #{tpu_custom_call.1} parent=11 // pred_region
          _
        $region40: #{tpu_custom_call.1} parent=11 // pred_fallthru
          _
        // Predicated region
        $region41: #{tpu_custom_call.1} parent=11 // pred_check
          %p409 = pneg %p221
        $region42: #{tpu_custom_call.1} parent=11 // pred_check_branch
          %411 = sbr.rel (%p409) target = $region44
        $region43: #{tpu_custom_call.1} parent=11 // pred_region
          _
        $region44: #{tpu_custom_call.1} parent=11 // pred_fallthru
          _
        // Predicated region
        $region45: #{tpu_custom_call.1} parent=11 // pred_check
          %p412 = pneg %p242
        $region46: #{tpu_custom_call.1} parent=11 // pred_check_branch
          %414 = sbr.rel (%p412) target = $region48
        $region47: #{tpu_custom_call.1} parent=11 // pred_region
          _
        $region48: #{tpu_custom_call.1} parent=11 // pred_fallthru
          _
        // Predicated region
        $region49: #{tpu_custom_call.1} parent=11 // pred_check
          %p415 = pneg %p263
        $region50: #{tpu_custom_call.1} parent=11 // pred_check_branch
          %417 = sbr.rel (%p415) target = $region52
        $region51: #{tpu_custom_call.1} parent=11 // pred_region
          _
        $region52: #{tpu_custom_call.1} parent=11 // pred_fallthru
          _
        // Predicated region
        $region53: #{tpu_custom_call.1} parent=11 // pred_check
          %p418 = pneg %p284
        $region54: #{tpu_custom_call.1} parent=11 // pred_check_branch
          %420 = sbr.rel (%p418) target = $region56
        $region55: #{tpu_custom_call.1} parent=11 // pred_region
          _
        $region56: #{tpu_custom_call.1} parent=11 // pred_fallthru
          _
        // Predicated region
        $region57: #{tpu_custom_call.1} parent=11 // pred_check
          %p421 = pneg %p305
        $region58: #{tpu_custom_call.1} parent=11 // pred_check_branch
          %423 = sbr.rel (%p421) target = $region60
        $region59: #{tpu_custom_call.1} parent=11 // pred_region
          _
        $region60: #{tpu_custom_call.1} parent=11 // pred_fallthru
          _
      $region12: #{tpu_custom_call.1} parent=5 // pred_fallthru
        _
      %p424 = scmp.lt.s32.totalorder %s27, 2
      // Predicated region
      $region61: #{tpu_custom_call.1} parent=5 // pred_check
        %p425 = pneg %p424
      $region62: #{tpu_custom_call.1} parent=5 // pred_check_branch
        %427 = sbr.rel (%p425) target = $region64
      $region63: #{tpu_custom_call.1} parent=5 // pred_region
        // Predicated region
        $region65: #{tpu_custom_call.1} parent=63 // pred_check
          %p428 = pneg %p47
        $region66: #{tpu_custom_call.1} parent=63 // pred_check_branch
          %430 = sbr.rel (%p428) target = $region68
        $region67: #{tpu_custom_call.1} parent=63 // pred_region
          %s431 = smul.u32 2, %s27
          %p432 = scmp.lt.s32.totalorder %s431, 3
          %s433 = scalar_select %p432, %s431, 3
          %s434 = smul.addr %s433, 2
          %s435 = smul.addr %s434, 4
          %s436 = scalar_lea.vmem %s0, %s435
          %s437 = smul.u32 2, %s27
        $region68: #{tpu_custom_call.1} parent=63 // pred_fallthru
          _
      $region64: #{tpu_custom_call.1} parent=5 // pred_fallthru
        _
      %p438 = scmp.le.s32.totalorder 1, %s27
      %p439 = scmp.lt.s32.totalorder %s27, 3
      %p440 = pnand %p438, %p439
      %p441 = pneg %p440
      // Predicated region
      $region69: #{tpu_custom_call.1} parent=5 // pred_check
        _
      $region70: #{tpu_custom_call.1} parent=5 // pred_check_branch
        %443 = sbr.rel (%p440) target = $region72
      $region71: #{tpu_custom_call.1} parent=5 // pred_region
        %s444 = ssub.s32 %s27, 1
        // Predicated region
        $region73: #{tpu_custom_call.1} parent=71 // pred_check
          %p445 = pneg %p74
        $region74: #{tpu_custom_call.1} parent=71 // pred_check_branch
          %447 = sbr.rel (%p445) target = $region76
        $region75: #{tpu_custom_call.1} parent=71 // pred_region
          %449 = dma.done [#allocation4], 12288
        $region76: #{tpu_custom_call.1} parent=71 // pred_fallthru
          _
        // Predicated region
        $region77: #{tpu_custom_call.1} parent=71 // pred_check
          %p450 = pneg %p116
        $region78: #{tpu_custom_call.1} parent=71 // pred_check_branch
          %452 = sbr.rel (%p450) target = $region80
        $region79: #{tpu_custom_call.1} parent=71 // pred_region
          %454 = dma.done [#allocation7], 24576
        $region80: #{tpu_custom_call.1} parent=71 // pred_fallthru
          _
        // Predicated region
        $region81: #{tpu_custom_call.1} parent=71 // pred_check
          %p455 = pneg %p137
        $region82: #{tpu_custom_call.1} parent=71 // pred_check_branch
          %457 = sbr.rel (%p455) target = $region84
        $region83: #{tpu_custom_call.1} parent=71 // pred_region
          %459 = dma.done [#allocation7], 64
        $region84: #{tpu_custom_call.1} parent=71 // pred_fallthru
          _
        // Predicated region
        $region85: #{tpu_custom_call.1} parent=71 // pred_check
          %p460 = pneg %p158
        $region86: #{tpu_custom_call.1} parent=71 // pred_check_branch
          %462 = sbr.rel (%p460) target = $region88
        $region87: #{tpu_custom_call.1} parent=71 // pred_region
          %464 = dma.done [#allocation10], 4096
        $region88: #{tpu_custom_call.1} parent=71 // pred_fallthru
          _
        %s465 = smul.u32 2, %s32
        %p466 = scmp.lt.s32.totalorder %s465, 3
        %s467 = scalar_select %p466, %s465, 3
        %s468 = smul.addr %s467, 2
        %s469 = smul.addr %s468, 4
        %s470 = scalar_lea.vmem %s0, %s469
        %p471 = pneg %p53
        %p472 = pneg %p50
        %p473 = pneg %p74
        %p474 = pneg %p71
        %p475 = pneg %p95
        %p476 = pneg %p92
        %p477 = pneg %p116
        %p478 = pneg %p113
        %p479 = pneg %p137
        %p480 = pneg %p134
        %p481 = pneg %p158
        %p482 = pneg %p155
        %p483 = pneg %p179
        %p484 = pneg %p176
        %p485 = pneg %p200
        %p486 = pneg %p197
        %p487 = pneg %p221
        %p488 = pneg %p218
        %p489 = pneg %p242
        %p490 = pneg %p239
        %p491 = pneg %p263
        %p492 = pneg %p260
        %p493 = pneg %p284
        %p494 = pneg %p281
        %p495 = pneg %p305
        %p496 = pneg %p302
        %p497 = pneg %p331
        %p498 = pneg %p328
        %s499 = sand.u32 %s318, 1
        %s500 = scalar_lea.sflag [#allocation5], %s499
        %s501 = sand.u32 %s318, 1
        %s502 = scalar_lea.vmem [#allocation11], %s501
        %s503 = smul.u32 2, %s32
        %p504 = scmp.lt.s32.totalorder %s503, 3
        %s505 = scalar_select %p504, %s503, 3
        %s506 = smul.addr %s505, 2
        %s507 = smul.addr %s506, 4
        %s508 = scalar_lea.vmem %s0, %s507
        %s509 = smul.u32 2, %s32
        %v510 = vld [vmem:[%s508] sm:$0xff]
        %v511 = vld [vmem:[%s508 + $0x8] sm:$0xff]
        %v512 = vld [vmem:[#allocation3] sm:$0xff]
        %v513 = vld [vmem:[#allocation3 + $0x8] sm:$0xff]
        %v514 = vld [vmem:[#allocation3 + $0x10] sm:$0xff]
        %v515 = vld [vmem:[#allocation3 + $0x18] sm:$0xff]
        %v516 = vld [vmem:[#allocation3 + $0x20] sm:$0xff]
        %v517 = vld [vmem:[#allocation3 + $0x28] sm:$0xff]
        %v518 = vld [vmem:[#allocation3 + $0x30] sm:$0xff]
        %v519 = vld [vmem:[#allocation3 + $0x38] sm:$0xff]
        %v520 = vld [vmem:[#allocation3 + $0x40] sm:$0xff]
        %v521 = vld [vmem:[#allocation3 + $0x48] sm:$0xff]
        %v522 = vld [vmem:[#allocation3 + $0x50] sm:$0xff]
        %v523 = vld [vmem:[#allocation3 + $0x58] sm:$0xff]
        %v524 = vld [vmem:[#allocation3 + $0x60] sm:$0xff]
        %v525 = vld [vmem:[#allocation3 + $0x68] sm:$0xff]
        %v526 = vld [vmem:[#allocation3 + $0x70] sm:$0xff]
        %v527 = vld [vmem:[#allocation3 + $0x78] sm:$0xff]
        %v528 = vld [vmem:[#allocation3 + $0x80] sm:$0xff]
        %v529 = vld [vmem:[#allocation3 + $0x88] sm:$0xff]
        %v530 = vld [vmem:[#allocation3 + $0x90] sm:$0xff]
        %v531 = vld [vmem:[#allocation3 + $0x98] sm:$0xff]
        %v532 = vld [vmem:[#allocation3 + $0xa0] sm:$0xff]
        %v533 = vld [vmem:[#allocation3 + $0xa8] sm:$0xff]
        %v534 = vld [vmem:[#allocation3 + $0xb0] sm:$0xff]
        %v535 = vld [vmem:[#allocation3 + $0xb8] sm:$0xff]
        %v536 = vld [vmem:[#allocation3 + $0xc0] sm:$0xff]
        %v537 = vld [vmem:[#allocation3 + $0xc8] sm:$0xff]
        %v538 = vld [vmem:[#allocation3 + $0xd0] sm:$0xff]
        %v539 = vld [vmem:[#allocation3 + $0xd8] sm:$0xff]
        %v540 = vld [vmem:[#allocation3 + $0xe0] sm:$0xff]
        %v541 = vld [vmem:[#allocation3 + $0xe8] sm:$0xff]
        %v542 = vld [vmem:[#allocation3 + $0xf0] sm:$0xff]
        %v543 = vld [vmem:[#allocation3 + $0xf8] sm:$0xff]
        %v544 = vld [vmem:[#allocation3 + $0x100] sm:$0xff]
        %v545 = vld [vmem:[#allocation3 + $0x108] sm:$0xff]
        %v546 = vld [vmem:[#allocation3 + $0x110] sm:$0xff]
        %v547 = vld [vmem:[#allocation3 + $0x118] sm:$0xff]
        %v548 = vld [vmem:[#allocation3 + $0x120] sm:$0xff]
        %v549 = vld [vmem:[#allocation3 + $0x128] sm:$0xff]
        %v550 = vld [vmem:[#allocation3 + $0x130] sm:$0xff]
        %v551 = vld [vmem:[#allocation3 + $0x138] sm:$0xff]
        %v552 = vld [vmem:[#allocation3 + $0x140] sm:$0xff]
        %v553 = vld [vmem:[#allocation3 + $0x148] sm:$0xff]
        %v554 = vld [vmem:[#allocation3 + $0x150] sm:$0xff]
        %v555 = vld [vmem:[#allocation3 + $0x158] sm:$0xff]
        %v556 = vld [vmem:[#allocation3 + $0x160] sm:$0xff]
        %v557 = vld [vmem:[#allocation3 + $0x168] sm:$0xff]
        %v558 = vld [vmem:[#allocation3 + $0x170] sm:$0xff]
        %v559 = vld [vmem:[#allocation3 + $0x178] sm:$0xff]
        %v560 = vld [vmem:[#allocation3 + $0x180] sm:$0xff]
        %v561 = vld [vmem:[#allocation3 + $0x188] sm:$0xff]
        %v562 = vld [vmem:[#allocation3 + $0x190] sm:$0xff]
        %v563 = vld [vmem:[#allocation3 + $0x198] sm:$0xff]
        %v564 = vld [vmem:[#allocation3 + $0x1a0] sm:$0xff]
        %v565 = vld [vmem:[#allocation3 + $0x1a8] sm:$0xff]
        %v566 = vld [vmem:[#allocation3 + $0x1b0] sm:$0xff]
        %v567 = vld [vmem:[#allocation3 + $0x1b8] sm:$0xff]
        %v568 = vld [vmem:[#allocation3 + $0x1c0] sm:$0xff]
        %v569 = vld [vmem:[#allocation3 + $0x1c8] sm:$0xff]
        %v570 = vld [vmem:[#allocation3 + $0x1d0] sm:$0xff]
        %v571 = vld [vmem:[#allocation3 + $0x1d8] sm:$0xff]
        %v572 = vld [vmem:[#allocation3 + $0x1e0] sm:$0xff]
        %v573 = vld [vmem:[#allocation3 + $0x1e8] sm:$0xff]
        %v574 = vld [vmem:[#allocation3 + $0x1f0] sm:$0xff]
        %v575 = vld [vmem:[#allocation3 + $0x1f8] sm:$0xff]
        %v576 = vld [vmem:[#allocation3 + $0x200] sm:$0xff]
        %v577 = vld [vmem:[#allocation3 + $0x208] sm:$0xff]
        %v578 = vld [vmem:[#allocation3 + $0x210] sm:$0xff]
        %v579 = vld [vmem:[#allocation3 + $0x218] sm:$0xff]
        %v580 = vld [vmem:[#allocation3 + $0x220] sm:$0xff]
        %v581 = vld [vmem:[#allocation3 + $0x228] sm:$0xff]
        %v582 = vld [vmem:[#allocation3 + $0x230] sm:$0xff]
        %v583 = vld [vmem:[#allocation3 + $0x238] sm:$0xff]
        %v584 = vld [vmem:[#allocation3 + $0x240] sm:$0xff]
        %v585 = vld [vmem:[#allocation3 + $0x248] sm:$0xff]
        %v586 = vld [vmem:[#allocation3 + $0x250] sm:$0xff]
        %v587 = vld [vmem:[#allocation3 + $0x258] sm:$0xff]
        %v588 = vld [vmem:[#allocation3 + $0x260] sm:$0xff]
        %v589 = vld [vmem:[#allocation3 + $0x268] sm:$0xff]
        %v590 = vld [vmem:[#allocation3 + $0x270] sm:$0xff]
        %v591 = vld [vmem:[#allocation3 + $0x278] sm:$0xff]
        %v592 = vld [vmem:[#allocation3 + $0x280] sm:$0xff]
        %v593 = vld [vmem:[#allocation3 + $0x288] sm:$0xff]
        %v594 = vld [vmem:[#allocation3 + $0x290] sm:$0xff]
        %v595 = vld [vmem:[#allocation3 + $0x298] sm:$0xff]
        %v596 = vld [vmem:[#allocation3 + $0x2a0] sm:$0xff]
        %v597 = vld [vmem:[#allocation3 + $0x2a8] sm:$0xff]
        %v598 = vld [vmem:[#allocation3 + $0x2b0] sm:$0xff]
        %v599 = vld [vmem:[#allocation3 + $0x2b8] sm:$0xff]
        %v600 = vld [vmem:[#allocation3 + $0x2c0] sm:$0xff]
        %v601 = vld [vmem:[#allocation3 + $0x2c8] sm:$0xff]
        %v602 = vld [vmem:[#allocation3 + $0x2d0] sm:$0xff]
        %v603 = vld [vmem:[#allocation3 + $0x2d8] sm:$0xff]
        %v604 = vld [vmem:[#allocation3 + $0x2e0] sm:$0xff]
        %v605 = vld [vmem:[#allocation3 + $0x2e8] sm:$0xff]
        %v606 = vld [vmem:[#allocation3 + $0x2f0] sm:$0xff]
        %v607 = vld [vmem:[#allocation3 + $0x2f8] sm:$0xff]
        %v608 = vld [vmem:[%s2] sm:$0x3f]
        %v610 = vperm.slane %v608, 0
        %v611 = vperm.slane %v608, 1
        %v612 = vperm.slane %v608, 2
        %v613 = vperm.slane %v608, 3
        %v614 = vperm.slane %v608, 4
        %v615 = vperm.slane %v608, 5
        %v624 = vunpack.c.l.b16 %v510
        %v625 = vunpack.c.h.b16 %v510
        %v626 = vunpack.c.l.b16 %v511
        %v627 = vunpack.c.h.b16 %v511
        %v628 = vpack.c.b16 %v626, %v624
        %v629 = vpack.c.b16 %v627, %v625
        %v728 = vunpack.c.l.b16 %v512
        %v729 = vunpack.c.h.b16 %v512
        %v730 = vunpack.c.l.b16 %v513
        %v731 = vunpack.c.h.b16 %v513
        %v732 = vunpack.c.l.b16 %v514
        %v733 = vunpack.c.h.b16 %v514
        %v734 = vunpack.c.l.b16 %v515
        %v735 = vunpack.c.h.b16 %v515
        %v736 = vunpack.c.l.b16 %v516
        %v737 = vunpack.c.h.b16 %v516
        %v738 = vunpack.c.l.b16 %v517
        %v739 = vunpack.c.h.b16 %v517
        %v740 = vunpack.c.l.b16 %v518
        %v741 = vunpack.c.h.b16 %v518
        %v742 = vunpack.c.l.b16 %v519
        %v743 = vunpack.c.h.b16 %v519
        %v744 = vunpack.c.l.b16 %v520
        %v745 = vunpack.c.h.b16 %v520
        %v746 = vunpack.c.l.b16 %v521
        %v747 = vunpack.c.h.b16 %v521
        %v748 = vunpack.c.l.b16 %v522
        %v749 = vunpack.c.h.b16 %v522
        %v750 = vunpack.c.l.b16 %v523
        %v751 = vunpack.c.h.b16 %v523
        %v752 = vunpack.c.l.b16 %v524
        %v753 = vunpack.c.h.b16 %v524
        %v754 = vunpack.c.l.b16 %v525
        %v755 = vunpack.c.h.b16 %v525
        %v756 = vunpack.c.l.b16 %v526
        %v757 = vunpack.c.h.b16 %v526
        %v758 = vunpack.c.l.b16 %v527
        %v759 = vunpack.c.h.b16 %v527
        %v760 = vunpack.c.l.b16 %v528
        %v761 = vunpack.c.h.b16 %v528
        %v762 = vunpack.c.l.b16 %v529
        %v763 = vunpack.c.h.b16 %v529
        %v764 = vunpack.c.l.b16 %v530
        %v765 = vunpack.c.h.b16 %v530
        %v766 = vunpack.c.l.b16 %v531
        %v767 = vunpack.c.h.b16 %v531
        %v768 = vunpack.c.l.b16 %v532
        %v769 = vunpack.c.h.b16 %v532
        %v770 = vunpack.c.l.b16 %v533
        %v771 = vunpack.c.h.b16 %v533
        %v772 = vunpack.c.l.b16 %v534
        %v773 = vunpack.c.h.b16 %v534
        %v774 = vunpack.c.l.b16 %v535
        %v775 = vunpack.c.h.b16 %v535
        %v776 = vunpack.c.l.b16 %v536
        %v777 = vunpack.c.h.b16 %v536
        %v778 = vunpack.c.l.b16 %v537
        %v779 = vunpack.c.h.b16 %v537
        %v780 = vunpack.c.l.b16 %v538
        %v781 = vunpack.c.h.b16 %v538
        %v782 = vunpack.c.l.b16 %v539
        %v783 = vunpack.c.h.b16 %v539
        %v784 = vunpack.c.l.b16 %v540
        %v785 = vunpack.c.h.b16 %v540
        %v786 = vunpack.c.l.b16 %v541
        %v787 = vunpack.c.h.b16 %v541
        %v788 = vunpack.c.l.b16 %v542
        %v789 = vunpack.c.h.b16 %v542
        %v790 = vunpack.c.l.b16 %v543
        %v791 = vunpack.c.h.b16 %v543
        %v792 = vunpack.c.l.b16 %v544
        %v793 = vunpack.c.h.b16 %v544
        %v794 = vunpack.c.l.b16 %v545
        %v795 = vunpack.c.h.b16 %v545
        %v796 = vunpack.c.l.b16 %v546
        %v797 = vunpack.c.h.b16 %v546
        %v798 = vunpack.c.l.b16 %v547
        %v799 = vunpack.c.h.b16 %v547
        %v800 = vunpack.c.l.b16 %v548
        %v801 = vunpack.c.h.b16 %v548
        %v802 = vunpack.c.l.b16 %v549
        %v803 = vunpack.c.h.b16 %v549
        %v804 = vunpack.c.l.b16 %v550
        %v805 = vunpack.c.h.b16 %v550
        %v806 = vunpack.c.l.b16 %v551
        %v807 = vunpack.c.h.b16 %v551
        %v808 = vunpack.c.l.b16 %v552
        %v809 = vunpack.c.h.b16 %v552
        %v810 = vunpack.c.l.b16 %v553
        %v811 = vunpack.c.h.b16 %v553
        %v812 = vunpack.c.l.b16 %v554
        %v813 = vunpack.c.h.b16 %v554
        %v814 = vunpack.c.l.b16 %v555
        %v815 = vunpack.c.h.b16 %v555
        %v816 = vunpack.c.l.b16 %v556
        %v817 = vunpack.c.h.b16 %v556
        %v818 = vunpack.c.l.b16 %v557
        %v819 = vunpack.c.h.b16 %v557
        %v820 = vunpack.c.l.b16 %v558
        %v821 = vunpack.c.h.b16 %v558
        %v822 = vunpack.c.l.b16 %v559
        %v823 = vunpack.c.h.b16 %v559
        %v824 = vunpack.c.l.b16 %v560
        %v825 = vunpack.c.h.b16 %v560
        %v826 = vunpack.c.l.b16 %v561
        %v827 = vunpack.c.h.b16 %v561
        %v828 = vunpack.c.l.b16 %v562
        %v829 = vunpack.c.h.b16 %v562
        %v830 = vunpack.c.l.b16 %v563
        %v831 = vunpack.c.h.b16 %v563
        %v832 = vunpack.c.l.b16 %v564
        %v833 = vunpack.c.h.b16 %v564
        %v834 = vunpack.c.l.b16 %v565
        %v835 = vunpack.c.h.b16 %v565
        %v836 = vunpack.c.l.b16 %v566
        %v837 = vunpack.c.h.b16 %v566
        %v838 = vunpack.c.l.b16 %v567
        %v839 = vunpack.c.h.b16 %v567
        %v840 = vunpack.c.l.b16 %v568
        %v841 = vunpack.c.h.b16 %v568
        %v842 = vunpack.c.l.b16 %v569
        %v843 = vunpack.c.h.b16 %v569
        %v844 = vunpack.c.l.b16 %v570
        %v845 = vunpack.c.h.b16 %v570
        %v846 = vunpack.c.l.b16 %v571
        %v847 = vunpack.c.h.b16 %v571
        %v848 = vunpack.c.l.b16 %v572
        %v849 = vunpack.c.h.b16 %v572
        %v850 = vunpack.c.l.b16 %v573
        %v851 = vunpack.c.h.b16 %v573
        %v852 = vunpack.c.l.b16 %v574
        %v853 = vunpack.c.h.b16 %v574
        %v854 = vunpack.c.l.b16 %v575
        %v855 = vunpack.c.h.b16 %v575
        %v856 = vunpack.c.l.b16 %v576
        %v857 = vunpack.c.h.b16 %v576
        %v858 = vunpack.c.l.b16 %v577
        %v859 = vunpack.c.h.b16 %v577
        %v860 = vunpack.c.l.b16 %v578
        %v861 = vunpack.c.h.b16 %v578
        %v862 = vunpack.c.l.b16 %v579
        %v863 = vunpack.c.h.b16 %v579
        %v864 = vunpack.c.l.b16 %v580
        %v865 = vunpack.c.h.b16 %v580
        %v866 = vunpack.c.l.b16 %v581
        %v867 = vunpack.c.h.b16 %v581
        %v868 = vunpack.c.l.b16 %v582
        %v869 = vunpack.c.h.b16 %v582
        %v870 = vunpack.c.l.b16 %v583
        %v871 = vunpack.c.h.b16 %v583
        %v872 = vunpack.c.l.b16 %v584
        %v873 = vunpack.c.h.b16 %v584
        %v874 = vunpack.c.l.b16 %v585
        %v875 = vunpack.c.h.b16 %v585
        %v876 = vunpack.c.l.b16 %v586
        %v877 = vunpack.c.h.b16 %v586
        %v878 = vunpack.c.l.b16 %v587
        %v879 = vunpack.c.h.b16 %v587
        %v880 = vunpack.c.l.b16 %v588
        %v881 = vunpack.c.h.b16 %v588
        %v882 = vunpack.c.l.b16 %v589
        %v883 = vunpack.c.h.b16 %v589
        %v884 = vunpack.c.l.b16 %v590
        %v885 = vunpack.c.h.b16 %v590
        %v886 = vunpack.c.l.b16 %v591
        %v887 = vunpack.c.h.b16 %v591
        %v888 = vunpack.c.l.b16 %v592
        %v889 = vunpack.c.h.b16 %v592
        %v890 = vunpack.c.l.b16 %v593
        %v891 = vunpack.c.h.b16 %v593
        %v892 = vunpack.c.l.b16 %v594
        %v893 = vunpack.c.h.b16 %v594
        %v894 = vunpack.c.l.b16 %v595
        %v895 = vunpack.c.h.b16 %v595
        %v896 = vunpack.c.l.b16 %v596
        %v897 = vunpack.c.h.b16 %v596
        %v898 = vunpack.c.l.b16 %v597
        %v899 = vunpack.c.h.b16 %v597
        %v900 = vunpack.c.l.b16 %v598
        %v901 = vunpack.c.h.b16 %v598
        %v902 = vunpack.c.l.b16 %v599
        %v903 = vunpack.c.h.b16 %v599
        %v904 = vunpack.c.l.b16 %v600
        %v905 = vunpack.c.h.b16 %v600
        %v906 = vunpack.c.l.b16 %v601
        %v907 = vunpack.c.h.b16 %v601
        %v908 = vunpack.c.l.b16 %v602
        %v909 = vunpack.c.h.b16 %v602
        %v910 = vunpack.c.l.b16 %v603
        %v911 = vunpack.c.h.b16 %v603
        %v912 = vunpack.c.l.b16 %v604
        %v913 = vunpack.c.h.b16 %v604
        %v914 = vunpack.c.l.b16 %v605
        %v915 = vunpack.c.h.b16 %v605
        %v916 = vunpack.c.l.b16 %v606
        %v917 = vunpack.c.h.b16 %v606
        %v918 = vunpack.c.l.b16 %v607
        %v919 = vunpack.c.h.b16 %v607
        %v920 = vpack.c.b16 %v734, %v728
        %v921 = vpack.c.b16 %v735, %v729
        %v922 = vpack.c.b16 %v736, %v730
        %v923 = vpack.c.b16 %v737, %v731
        %v924 = vpack.c.b16 %v738, %v732
        %v925 = vpack.c.b16 %v739, %v733
        %v926 = vpack.c.b16 %v746, %v740
        %v927 = vpack.c.b16 %v747, %v741
        %v928 = vpack.c.b16 %v748, %v742
        %v929 = vpack.c.b16 %v749, %v743
        %v930 = vpack.c.b16 %v750, %v744
        %v931 = vpack.c.b16 %v751, %v745
        %v932 = vpack.c.b16 %v758, %v752
        %v933 = vpack.c.b16 %v759, %v753
        %v934 = vpack.c.b16 %v760, %v754
        %v935 = vpack.c.b16 %v761, %v755
        %v936 = vpack.c.b16 %v762, %v756
        %v937 = vpack.c.b16 %v763, %v757
        %v938 = vpack.c.b16 %v770, %v764
        %v939 = vpack.c.b16 %v771, %v765
        %v940 = vpack.c.b16 %v772, %v766
        %v941 = vpack.c.b16 %v773, %v767
        %v942 = vpack.c.b16 %v774, %v768
        %v943 = vpack.c.b16 %v775, %v769
        %v944 = vpack.c.b16 %v782, %v776
        %v945 = vpack.c.b16 %v783, %v777
        %v946 = vpack.c.b16 %v784, %v778
        %v947 = vpack.c.b16 %v785, %v779
        %v948 = vpack.c.b16 %v786, %v780
        %v949 = vpack.c.b16 %v787, %v781
        %v950 = vpack.c.b16 %v794, %v788
        %v951 = vpack.c.b16 %v795, %v789
        %v952 = vpack.c.b16 %v796, %v790
        %v953 = vpack.c.b16 %v797, %v791
        %v954 = vpack.c.b16 %v798, %v792
        %v955 = vpack.c.b16 %v799, %v793
        %v956 = vpack.c.b16 %v806, %v800
        %v957 = vpack.c.b16 %v807, %v801
        %v958 = vpack.c.b16 %v808, %v802
        %v959 = vpack.c.b16 %v809, %v803
        %v960 = vpack.c.b16 %v810, %v804
        %v961 = vpack.c.b16 %v811, %v805
        %v962 = vpack.c.b16 %v818, %v812
        %v963 = vpack.c.b16 %v819, %v813
        %v964 = vpack.c.b16 %v820, %v814
        %v965 = vpack.c.b16 %v821, %v815
        %v966 = vpack.c.b16 %v822, %v816
        %v967 = vpack.c.b16 %v823, %v817
        %v968 = vpack.c.b16 %v830, %v824
        %v969 = vpack.c.b16 %v831, %v825
        %v970 = vpack.c.b16 %v832, %v826
        %v971 = vpack.c.b16 %v833, %v827
        %v972 = vpack.c.b16 %v834, %v828
        %v973 = vpack.c.b16 %v835, %v829
        %v974 = vpack.c.b16 %v842, %v836
        %v975 = vpack.c.b16 %v843, %v837
        %v976 = vpack.c.b16 %v844, %v838
        %v977 = vpack.c.b16 %v845, %v839
        %v978 = vpack.c.b16 %v846, %v840
        %v979 = vpack.c.b16 %v847, %v841
        %v980 = vpack.c.b16 %v854, %v848
        %v981 = vpack.c.b16 %v855, %v849
        %v982 = vpack.c.b16 %v856, %v850
        %v983 = vpack.c.b16 %v857, %v851
        %v984 = vpack.c.b16 %v858, %v852
        %v985 = vpack.c.b16 %v859, %v853
        %v986 = vpack.c.b16 %v866, %v860
        %v987 = vpack.c.b16 %v867, %v861
        %v988 = vpack.c.b16 %v868, %v862
        %v989 = vpack.c.b16 %v869, %v863
        %v990 = vpack.c.b16 %v870, %v864
        %v991 = vpack.c.b16 %v871, %v865
        %v992 = vpack.c.b16 %v878, %v872
        %v993 = vpack.c.b16 %v879, %v873
        %v994 = vpack.c.b16 %v880, %v874
        %v995 = vpack.c.b16 %v881, %v875
        %v996 = vpack.c.b16 %v882, %v876
        %v997 = vpack.c.b16 %v883, %v877
        %v998 = vpack.c.b16 %v890, %v884
        %v999 = vpack.c.b16 %v891, %v885
        %v1000 = vpack.c.b16 %v892, %v886
        %v1001 = vpack.c.b16 %v893, %v887
        %v1002 = vpack.c.b16 %v894, %v888
        %v1003 = vpack.c.b16 %v895, %v889
        %v1004 = vpack.c.b16 %v902, %v896
        %v1005 = vpack.c.b16 %v903, %v897
        %v1006 = vpack.c.b16 %v904, %v898
        %v1007 = vpack.c.b16 %v905, %v899
        %v1008 = vpack.c.b16 %v906, %v900
        %v1009 = vpack.c.b16 %v907, %v901
        %v1010 = vpack.c.b16 %v914, %v908
        %v1011 = vpack.c.b16 %v915, %v909
        %v1012 = vpack.c.b16 %v916, %v910
        %v1013 = vpack.c.b16 %v917, %v911
        %v1014 = vpack.c.b16 %v918, %v912
        %v1015 = vpack.c.b16 %v919, %v913
        %1112 = vmatpush.bf16.msra.mxu0 %v962
        %1113 = vmatpush.bf16.msra.mxu0 %v956
        %1114 = vmatpush.bf16.msra.mxu0 %v950
        %1115 = vmatpush.bf16.msra.mxu0 %v944
        %1116 = vmatpush.bf16.msra.mxu0 %v938
        %1117 = vmatpush.bf16.msra.mxu0 %v932
        %1118 = vmatpush.bf16.msra.mxu0 %v926
        %1119 = vmatpush.bf16.msra.mxu0 %v920
        %1120 = vmatmul.bf16.gmra.mxu0 %v628
        %v1121 = vpop.f32.mrf.mxu0
        %v1122 = vadd.f32 %v610, %v1121
        %v1123 = vpop.f32.mrf.mxu0
        %v1124 = vadd.f32 %v610, %v1123
        %1125 = vdwg.mxu0
        %1126 = vmatpush.bf16.msra.mxu0 %v1010
        %1127 = vmatpush.bf16.msra.mxu0 %v1004
        %1128 = vmatpush.bf16.msra.mxu0 %v998
        %1129 = vmatpush.bf16.msra.mxu0 %v992
        %1130 = vmatpush.bf16.msra.mxu0 %v986
        %1131 = vmatpush.bf16.msra.mxu0 %v980
        %1132 = vmatpush.bf16.msra.mxu0 %v974
        %1133 = vmatpush.bf16.msra.mxu0 %v968
        %1134 = vmatmul.bf16.gmra.mxu0 %v629
        %v1135 = vpop.f32.mrf.mxu0
        %v1136 = vadd.f32 %v1122, %v1135
        %v1137 = vpop.f32.mrf.mxu0
        %v1138 = vadd.f32 %v1124, %v1137
        %1139 = vdwg.mxu0
        %1140 = vmatpush.bf16.msra.mxu0 %v963
        %1141 = vmatpush.bf16.msra.mxu0 %v957
        %1142 = vmatpush.bf16.msra.mxu0 %v951
        %1143 = vmatpush.bf16.msra.mxu0 %v945
        %1144 = vmatpush.bf16.msra.mxu0 %v939
        %1145 = vmatpush.bf16.msra.mxu0 %v933
        %1146 = vmatpush.bf16.msra.mxu0 %v927
        %1147 = vmatpush.bf16.msra.mxu0 %v921
        %1148 = vmatmul.bf16.gmra.mxu0 %v628
        %v1149 = vpop.f32.mrf.mxu0
        %v1150 = vadd.f32 %v611, %v1149
        %v1151 = vpop.f32.mrf.mxu0
        %v1152 = vadd.f32 %v611, %v1151
        %1153 = vdwg.mxu0
        %1154 = vmatpush.bf16.msra.mxu0 %v1011
        %1155 = vmatpush.bf16.msra.mxu0 %v1005
        %1156 = vmatpush.bf16.msra.mxu0 %v999
        %1157 = vmatpush.bf16.msra.mxu0 %v993
        %1158 = vmatpush.bf16.msra.mxu0 %v987
        %1159 = vmatpush.bf16.msra.mxu0 %v981
        %1160 = vmatpush.bf16.msra.mxu0 %v975
        %1161 = vmatpush.bf16.msra.mxu0 %v969
        %1162 = vmatmul.bf16.gmra.mxu0 %v629
        %v1163 = vpop.f32.mrf.mxu0
        %v1164 = vadd.f32 %v1150, %v1163
        %v1165 = vpop.f32.mrf.mxu0
        %v1166 = vadd.f32 %v1152, %v1165
        %1167 = vdwg.mxu0
        %1168 = vmatpush.bf16.msra.mxu0 %v964
        %1169 = vmatpush.bf16.msra.mxu0 %v958
        %1170 = vmatpush.bf16.msra.mxu0 %v952
        %1171 = vmatpush.bf16.msra.mxu0 %v946
        %1172 = vmatpush.bf16.msra.mxu0 %v940
        %1173 = vmatpush.bf16.msra.mxu0 %v934
        %1174 = vmatpush.bf16.msra.mxu0 %v928
        %1175 = vmatpush.bf16.msra.mxu0 %v922
        %1176 = vmatmul.bf16.gmra.mxu0 %v628
        %v1177 = vpop.f32.mrf.mxu0
        %v1178 = vadd.f32 %v612, %v1177
        %v1179 = vpop.f32.mrf.mxu0
        %v1180 = vadd.f32 %v612, %v1179
        %1181 = vdwg.mxu0
        %1182 = vmatpush.bf16.msra.mxu0 %v1012
        %1183 = vmatpush.bf16.msra.mxu0 %v1006
        %1184 = vmatpush.bf16.msra.mxu0 %v1000
        %1185 = vmatpush.bf16.msra.mxu0 %v994
        %1186 = vmatpush.bf16.msra.mxu0 %v988
        %1187 = vmatpush.bf16.msra.mxu0 %v982
        %1188 = vmatpush.bf16.msra.mxu0 %v976
        %1189 = vmatpush.bf16.msra.mxu0 %v970
        %1190 = vmatmul.bf16.gmra.mxu0 %v629
        %v1191 = vpop.f32.mrf.mxu0
        %v1192 = vadd.f32 %v1178, %v1191
        %v1193 = vpop.f32.mrf.mxu0
        %v1194 = vadd.f32 %v1180, %v1193
        %1195 = vdwg.mxu0
        %1196 = vmatpush.bf16.msra.mxu0 %v965
        %1197 = vmatpush.bf16.msra.mxu0 %v959
        %1198 = vmatpush.bf16.msra.mxu0 %v953
        %1199 = vmatpush.bf16.msra.mxu0 %v947
        %1200 = vmatpush.bf16.msra.mxu0 %v941
        %1201 = vmatpush.bf16.msra.mxu0 %v935
        %1202 = vmatpush.bf16.msra.mxu0 %v929
        %1203 = vmatpush.bf16.msra.mxu0 %v923
        %1204 = vmatmul.bf16.gmra.mxu0 %v628
        %v1205 = vpop.f32.mrf.mxu0
        %v1206 = vadd.f32 %v613, %v1205
        %v1207 = vpop.f32.mrf.mxu0
        %v1208 = vadd.f32 %v613, %v1207
        %1209 = vdwg.mxu0
        %1210 = vmatpush.bf16.msra.mxu0 %v1013
        %1211 = vmatpush.bf16.msra.mxu0 %v1007
        %1212 = vmatpush.bf16.msra.mxu0 %v1001
        %1213 = vmatpush.bf16.msra.mxu0 %v995
        %1214 = vmatpush.bf16.msra.mxu0 %v989
        %1215 = vmatpush.bf16.msra.mxu0 %v983
        %1216 = vmatpush.bf16.msra.mxu0 %v977
        %1217 = vmatpush.bf16.msra.mxu0 %v971
        %1218 = vmatmul.bf16.gmra.mxu0 %v629
        %v1219 = vpop.f32.mrf.mxu0
        %v1220 = vadd.f32 %v1206, %v1219
        %v1221 = vpop.f32.mrf.mxu0
        %v1222 = vadd.f32 %v1208, %v1221
        %1223 = vdwg.mxu0
        %1224 = vmatpush.bf16.msra.mxu0 %v966
        %1225 = vmatpush.bf16.msra.mxu0 %v960
        %1226 = vmatpush.bf16.msra.mxu0 %v954
        %1227 = vmatpush.bf16.msra.mxu0 %v948
        %1228 = vmatpush.bf16.msra.mxu0 %v942
        %1229 = vmatpush.bf16.msra.mxu0 %v936
        %1230 = vmatpush.bf16.msra.mxu0 %v930
        %1231 = vmatpush.bf16.msra.mxu0 %v924
        %1232 = vmatmul.bf16.gmra.mxu0 %v628
        %v1233 = vpop.f32.mrf.mxu0
        %v1234 = vadd.f32 %v614, %v1233
        %v1235 = vpop.f32.mrf.mxu0
        %v1236 = vadd.f32 %v614, %v1235
        %1237 = vdwg.mxu0
        %1238 = vmatpush.bf16.msra.mxu0 %v1014
        %1239 = vmatpush.bf16.msra.mxu0 %v1008
        %1240 = vmatpush.bf16.msra.mxu0 %v1002
        %1241 = vmatpush.bf16.msra.mxu0 %v996
        %1242 = vmatpush.bf16.msra.mxu0 %v990
        %1243 = vmatpush.bf16.msra.mxu0 %v984
        %1244 = vmatpush.bf16.msra.mxu0 %v978
        %1245 = vmatpush.bf16.msra.mxu0 %v972
        %1246 = vmatmul.bf16.gmra.mxu0 %v629
        %v1247 = vpop.f32.mrf.mxu0
        %v1248 = vadd.f32 %v1234, %v1247
        %v1249 = vpop.f32.mrf.mxu0
        %v1250 = vadd.f32 %v1236, %v1249
        %1251 = vdwg.mxu0
        %1252 = vmatpush.bf16.msra.mxu0 %v967
        %1253 = vmatpush.bf16.msra.mxu0 %v961
        %1254 = vmatpush.bf16.msra.mxu0 %v955
        %1255 = vmatpush.bf16.msra.mxu0 %v949
        %1256 = vmatpush.bf16.msra.mxu0 %v943
        %1257 = vmatpush.bf16.msra.mxu0 %v937
        %1258 = vmatpush.bf16.msra.mxu0 %v931
        %1259 = vmatpush.bf16.msra.mxu0 %v925
        %1260 = vmatmul.bf16.gmra.mxu0 %v628
        %v1261 = vpop.f32.mrf.mxu0
        %v1262 = vadd.f32 %v615, %v1261
        %v1263 = vpop.f32.mrf.mxu0
        %v1264 = vadd.f32 %v615, %v1263
        %1265 = vdwg.mxu0
        %1266 = vmatpush.bf16.msra.mxu0 %v1015
        %1267 = vmatpush.bf16.msra.mxu0 %v1009
        %1268 = vmatpush.bf16.msra.mxu0 %v1003
        %1269 = vmatpush.bf16.msra.mxu0 %v997
        %1270 = vmatpush.bf16.msra.mxu0 %v991
        %1271 = vmatpush.bf16.msra.mxu0 %v985
        %1272 = vmatpush.bf16.msra.mxu0 %v979
        %1273 = vmatpush.bf16.msra.mxu0 %v973
        %1274 = vmatmul.bf16.gmra.mxu0 %v629
        %v1275 = vpop.f32.mrf.mxu0
        %v1276 = vadd.f32 %v1262, %v1275
        %v1277 = vpop.f32.mrf.mxu0
        %v1278 = vadd.f32 %v1264, %v1277
        %1279 = vdwg.mxu0
        %v1280 = vmax.f32 %v1136, 0.0
        %v1281 = vmax.f32 %v1164, 0.0
        %v1282 = vmax.f32 %v1192, 0.0
        %v1283 = vmax.f32 %v1220, 0.0
        %v1284 = vmax.f32 %v1248, 0.0
        %v1285 = vmax.f32 %v1276, 0.0
        %v1286 = vmax.f32 %v1138, 0.0
        %v1287 = vmax.f32 %v1166, 0.0
        %v1288 = vmax.f32 %v1194, 0.0
        %v1289 = vmax.f32 %v1222, 0.0
        %v1290 = vmax.f32 %v1250, 0.0
        %v1291 = vmax.f32 %v1278, 0.0
        %v1292 = vpack.c.bf16 %v1286, %v1280
        %v1293 = vpack.c.bf16 %v1287, %v1281
        %v1294 = vpack.c.bf16 %v1288, %v1282
        %v1295 = vpack.c.bf16 %v1289, %v1283
        %v1296 = vpack.c.bf16 %v1290, %v1284
        %v1297 = vpack.c.bf16 %v1291, %v1285
        %v1298 = vld [vmem:[#allocation6] sm:$0xff]
        %v1299 = vld [vmem:[#allocation6 + $0x8] sm:$0xff]
        %v1300 = vld [vmem:[#allocation6 + $0x10] sm:$0xff]
        %v1301 = vld [vmem:[#allocation6 + $0x18] sm:$0xff]
        %v1302 = vld [vmem:[#allocation6 + $0x20] sm:$0xff]
        %v1303 = vld [vmem:[#allocation6 + $0x28] sm:$0xff]
        %v1304 = vld [vmem:[#allocation6 + $0x30] sm:$0xff]
        %v1305 = vld [vmem:[#allocation6 + $0x38] sm:$0xff]
        %v1306 = vld [vmem:[#allocation6 + $0x40] sm:$0xff]
        %v1307 = vld [vmem:[#allocation6 + $0x48] sm:$0xff]
        %v1308 = vld [vmem:[#allocation6 + $0x50] sm:$0xff]
        %v1309 = vld [vmem:[#allocation6 + $0x58] sm:$0xff]
        %v1310 = vld [vmem:[#allocation6 + $0x60] sm:$0xff]
        %v1311 = vld [vmem:[#allocation6 + $0x68] sm:$0xff]
        %v1312 = vld [vmem:[#allocation6 + $0x70] sm:$0xff]
        %v1313 = vld [vmem:[#allocation6 + $0x78] sm:$0xff]
        %v1314 = vld [vmem:[#allocation6 + $0x80] sm:$0xff]
        %v1315 = vld [vmem:[#allocation6 + $0x88] sm:$0xff]
        %v1316 = vld [vmem:[#allocation6 + $0x90] sm:$0xff]
        %v1317 = vld [vmem:[#allocation6 + $0x98] sm:$0xff]
        %v1318 = vld [vmem:[#allocation6 + $0xa0] sm:$0xff]
        %v1319 = vld [vmem:[#allocation6 + $0xa8] sm:$0xff]
        %v1320 = vld [vmem:[#allocation6 + $0xb0] sm:$0xff]
        %v1321 = vld [vmem:[#allocation6 + $0xb8] sm:$0xff]
        %v1322 = vld [vmem:[#allocation6 + $0xc0] sm:$0xff]
        %v1323 = vld [vmem:[#allocation6 + $0xc8] sm:$0xff]
        %v1324 = vld [vmem:[#allocation6 + $0xd0] sm:$0xff]
        %v1325 = vld [vmem:[#allocation6 + $0xd8] sm:$0xff]
        %v1326 = vld [vmem:[#allocation6 + $0xe0] sm:$0xff]
        %v1327 = vld [vmem:[#allocation6 + $0xe8] sm:$0xff]
        %v1328 = vld [vmem:[#allocation6 + $0xf0] sm:$0xff]
        %v1329 = vld [vmem:[#allocation6 + $0xf8] sm:$0xff]
        %v1330 = vld [vmem:[#allocation6 + $0x100] sm:$0xff]
        %v1331 = vld [vmem:[#allocation6 + $0x108] sm:$0xff]
        %v1332 = vld [vmem:[#allocation6 + $0x110] sm:$0xff]
        %v1333 = vld [vmem:[#allocation6 + $0x118] sm:$0xff]
        %v1334 = vld [vmem:[#allocation6 + $0x120] sm:$0xff]
        %v1335 = vld [vmem:[#allocation6 + $0x128] sm:$0xff]
        %v1336 = vld [vmem:[#allocation6 + $0x130] sm:$0xff]
        %v1337 = vld [vmem:[#allocation6 + $0x138] sm:$0xff]
        %v1338 = vld [vmem:[#allocation6 + $0x140] sm:$0xff]
        %v1339 = vld [vmem:[#allocation6 + $0x148] sm:$0xff]
        %v1340 = vld [vmem:[#allocation6 + $0x150] sm:$0xff]
        %v1341 = vld [vmem:[#allocation6 + $0x158] sm:$0xff]
        %v1342 = vld [vmem:[#allocation6 + $0x160] sm:$0xff]
        %v1343 = vld [vmem:[#allocation6 + $0x168] sm:$0xff]
        %v1344 = vld [vmem:[#allocation6 + $0x170] sm:$0xff]
        %v1345 = vld [vmem:[#allocation6 + $0x178] sm:$0xff]
        %v1346 = vld [vmem:[#allocation6 + $0x180] sm:$0xff]
        %v1347 = vld [vmem:[#allocation6 + $0x188] sm:$0xff]
        %v1348 = vld [vmem:[#allocation6 + $0x190] sm:$0xff]
        %v1349 = vld [vmem:[#allocation6 + $0x198] sm:$0xff]
        %v1350 = vld [vmem:[#allocation6 + $0x1a0] sm:$0xff]
        %v1351 = vld [vmem:[#allocation6 + $0x1a8] sm:$0xff]
        %v1352 = vld [vmem:[#allocation6 + $0x1b0] sm:$0xff]
        %v1353 = vld [vmem:[#allocation6 + $0x1b8] sm:$0xff]
        %v1354 = vld [vmem:[#allocation6 + $0x1c0] sm:$0xff]
        %v1355 = vld [vmem:[#allocation6 + $0x1c8] sm:$0xff]
        %v1356 = vld [vmem:[#allocation6 + $0x1d0] sm:$0xff]
        %v1357 = vld [vmem:[#allocation6 + $0x1d8] sm:$0xff]
        %v1358 = vld [vmem:[#allocation6 + $0x1e0] sm:$0xff]
        %v1359 = vld [vmem:[#allocation6 + $0x1e8] sm:$0xff]
        %v1360 = vld [vmem:[#allocation6 + $0x1f0] sm:$0xff]
        %v1361 = vld [vmem:[#allocation6 + $0x1f8] sm:$0xff]
        %v1362 = vld [vmem:[#allocation6 + $0x200] sm:$0xff]
        %v1363 = vld [vmem:[#allocation6 + $0x208] sm:$0xff]
        %v1364 = vld [vmem:[#allocation6 + $0x210] sm:$0xff]
        %v1365 = vld [vmem:[#allocation6 + $0x218] sm:$0xff]
        %v1366 = vld [vmem:[#allocation6 + $0x220] sm:$0xff]
        %v1367 = vld [vmem:[#allocation6 + $0x228] sm:$0xff]
        %v1368 = vld [vmem:[#allocation6 + $0x230] sm:$0xff]
        %v1369 = vld [vmem:[#allocation6 + $0x238] sm:$0xff]
        %v1370 = vld [vmem:[#allocation6 + $0x240] sm:$0xff]
        %v1371 = vld [vmem:[#allocation6 + $0x248] sm:$0xff]
        %v1372 = vld [vmem:[#allocation6 + $0x250] sm:$0xff]
        %v1373 = vld [vmem:[#allocation6 + $0x258] sm:$0xff]
        %v1374 = vld [vmem:[#allocation6 + $0x260] sm:$0xff]
        %v1375 = vld [vmem:[#allocation6 + $0x268] sm:$0xff]
        %v1376 = vld [vmem:[#allocation6 + $0x270] sm:$0xff]
        %v1377 = vld [vmem:[#allocation6 + $0x278] sm:$0xff]
        %v1378 = vld [vmem:[#allocation6 + $0x280] sm:$0xff]
        %v1379 = vld [vmem:[#allocation6 + $0x288] sm:$0xff]
        %v1380 = vld [vmem:[#allocation6 + $0x290] sm:$0xff]
        %v1381 = vld [vmem:[#allocation6 + $0x298] sm:$0xff]
        %v1382 = vld [vmem:[#allocation6 + $0x2a0] sm:$0xff]
        %v1383 = vld [vmem:[#allocation6 + $0x2a8] sm:$0xff]
        %v1384 = vld [vmem:[#allocation6 + $0x2b0] sm:$0xff]
        %v1385 = vld [vmem:[#allocation6 + $0x2b8] sm:$0xff]
        %v1386 = vld [vmem:[#allocation6 + $0x2c0] sm:$0xff]
        %v1387 = vld [vmem:[#allocation6 + $0x2c8] sm:$0xff]
        %v1388 = vld [vmem:[#allocation6 + $0x2d0] sm:$0xff]
        %v1389 = vld [vmem:[#allocation6 + $0x2d8] sm:$0xff]
        %v1390 = vld [vmem:[#allocation6 + $0x2e0] sm:$0xff]
        %v1391 = vld [vmem:[#allocation6 + $0x2e8] sm:$0xff]
        %v1392 = vld [vmem:[#allocation6 + $0x2f0] sm:$0xff]
        %v1393 = vld [vmem:[#allocation6 + $0x2f8] sm:$0xff]
        %v1394 = vld [vmem:[#allocation6 + $0x300] sm:$0xff]
        %v1395 = vld [vmem:[#allocation6 + $0x308] sm:$0xff]
        %v1396 = vld [vmem:[#allocation6 + $0x310] sm:$0xff]
        %v1397 = vld [vmem:[#allocation6 + $0x318] sm:$0xff]
        %v1398 = vld [vmem:[#allocation6 + $0x320] sm:$0xff]
        %v1399 = vld [vmem:[#allocation6 + $0x328] sm:$0xff]
        %v1400 = vld [vmem:[#allocation6 + $0x330] sm:$0xff]
        %v1401 = vld [vmem:[#allocation6 + $0x338] sm:$0xff]
        %v1402 = vld [vmem:[#allocation6 + $0x340] sm:$0xff]
        %v1403 = vld [vmem:[#allocation6 + $0x348] sm:$0xff]
        %v1404 = vld [vmem:[#allocation6 + $0x350] sm:$0xff]
        %v1405 = vld [vmem:[#allocation6 + $0x358] sm:$0xff]
        %v1406 = vld [vmem:[#allocation6 + $0x360] sm:$0xff]
        %v1407 = vld [vmem:[#allocation6 + $0x368] sm:$0xff]
        %v1408 = vld [vmem:[#allocation6 + $0x370] sm:$0xff]
        %v1409 = vld [vmem:[#allocation6 + $0x378] sm:$0xff]
        %v1410 = vld [vmem:[#allocation6 + $0x380] sm:$0xff]
        %v1411 = vld [vmem:[#allocation6 + $0x388] sm:$0xff]
        %v1412 = vld [vmem:[#allocation6 + $0x390] sm:$0xff]
        %v1413 = vld [vmem:[#allocation6 + $0x398] sm:$0xff]
        %v1414 = vld [vmem:[#allocation6 + $0x3a0] sm:$0xff]
        %v1415 = vld [vmem:[#allocation6 + $0x3a8] sm:$0xff]
        %v1416 = vld [vmem:[#allocation6 + $0x3b0] sm:$0xff]
        %v1417 = vld [vmem:[#allocation6 + $0x3b8] sm:$0xff]
        %v1418 = vld [vmem:[#allocation6 + $0x3c0] sm:$0xff]
        %v1419 = vld [vmem:[#allocation6 + $0x3c8] sm:$0xff]
        %v1420 = vld [vmem:[#allocation6 + $0x3d0] sm:$0xff]
        %v1421 = vld [vmem:[#allocation6 + $0x3d8] sm:$0xff]
        %v1422 = vld [vmem:[#allocation6 + $0x3e0] sm:$0xff]
        %v1423 = vld [vmem:[#allocation6 + $0x3e8] sm:$0xff]
        %v1424 = vld [vmem:[#allocation6 + $0x3f0] sm:$0xff]
        %v1425 = vld [vmem:[#allocation6 + $0x3f8] sm:$0xff]
        %v1426 = vld [vmem:[#allocation6 + $0x400] sm:$0xff]
        %v1427 = vld [vmem:[#allocation6 + $0x408] sm:$0xff]
        %v1428 = vld [vmem:[#allocation6 + $0x410] sm:$0xff]
        %v1429 = vld [vmem:[#allocation6 + $0x418] sm:$0xff]
        %v1430 = vld [vmem:[#allocation6 + $0x420] sm:$0xff]
        %v1431 = vld [vmem:[#allocation6 + $0x428] sm:$0xff]
        %v1432 = vld [vmem:[#allocation6 + $0x430] sm:$0xff]
        %v1433 = vld [vmem:[#allocation6 + $0x438] sm:$0xff]
        %v1434 = vld [vmem:[#allocation6 + $0x440] sm:$0xff]
        %v1435 = vld [vmem:[#allocation6 + $0x448] sm:$0xff]
        %v1436 = vld [vmem:[#allocation6 + $0x450] sm:$0xff]
        %v1437 = vld [vmem:[#allocation6 + $0x458] sm:$0xff]
        %v1438 = vld [vmem:[#allocation6 + $0x460] sm:$0xff]
        %v1439 = vld [vmem:[#allocation6 + $0x468] sm:$0xff]
        %v1440 = vld [vmem:[#allocation6 + $0x470] sm:$0xff]
        %v1441 = vld [vmem:[#allocation6 + $0x478] sm:$0xff]
        %v1442 = vld [vmem:[#allocation6 + $0x480] sm:$0xff]
        %v1443 = vld [vmem:[#allocation6 + $0x488] sm:$0xff]
        %v1444 = vld [vmem:[#allocation6 + $0x490] sm:$0xff]
        %v1445 = vld [vmem:[#allocation6 + $0x498] sm:$0xff]
        %v1446 = vld [vmem:[#allocation6 + $0x4a0] sm:$0xff]
        %v1447 = vld [vmem:[#allocation6 + $0x4a8] sm:$0xff]
        %v1448 = vld [vmem:[#allocation6 + $0x4b0] sm:$0xff]
        %v1449 = vld [vmem:[#allocation6 + $0x4b8] sm:$0xff]
        %v1450 = vld [vmem:[#allocation6 + $0x4c0] sm:$0xff]
        %v1451 = vld [vmem:[#allocation6 + $0x4c8] sm:$0xff]
        %v1452 = vld [vmem:[#allocation6 + $0x4d0] sm:$0xff]
        %v1453 = vld [vmem:[#allocation6 + $0x4d8] sm:$0xff]
        %v1454 = vld [vmem:[#allocation6 + $0x4e0] sm:$0xff]
        %v1455 = vld [vmem:[#allocation6 + $0x4e8] sm:$0xff]
        %v1456 = vld [vmem:[#allocation6 + $0x4f0] sm:$0xff]
        %v1457 = vld [vmem:[#allocation6 + $0x4f8] sm:$0xff]
        %v1458 = vld [vmem:[#allocation6 + $0x500] sm:$0xff]
        %v1459 = vld [vmem:[#allocation6 + $0x508] sm:$0xff]
        %v1460 = vld [vmem:[#allocation6 + $0x510] sm:$0xff]
        %v1461 = vld [vmem:[#allocation6 + $0x518] sm:$0xff]
        %v1462 = vld [vmem:[#allocation6 + $0x520] sm:$0xff]
        %v1463 = vld [vmem:[#allocation6 + $0x528] sm:$0xff]
        %v1464 = vld [vmem:[#allocation6 + $0x530] sm:$0xff]
        %v1465 = vld [vmem:[#allocation6 + $0x538] sm:$0xff]
        %v1466 = vld [vmem:[#allocation6 + $0x540] sm:$0xff]
        %v1467 = vld [vmem:[#allocation6 + $0x548] sm:$0xff]
        %v1468 = vld [vmem:[#allocation6 + $0x550] sm:$0xff]
        %v1469 = vld [vmem:[#allocation6 + $0x558] sm:$0xff]
        %v1470 = vld [vmem:[#allocation6 + $0x560] sm:$0xff]
        %v1471 = vld [vmem:[#allocation6 + $0x568] sm:$0xff]
        %v1472 = vld [vmem:[#allocation6 + $0x570] sm:$0xff]
        %v1473 = vld [vmem:[#allocation6 + $0x578] sm:$0xff]
        %v1474 = vld [vmem:[#allocation6 + $0x580] sm:$0xff]
        %v1475 = vld [vmem:[#allocation6 + $0x588] sm:$0xff]
        %v1476 = vld [vmem:[#allocation6 + $0x590] sm:$0xff]
        %v1477 = vld [vmem:[#allocation6 + $0x598] sm:$0xff]
        %v1478 = vld [vmem:[#allocation6 + $0x5a0] sm:$0xff]
        %v1479 = vld [vmem:[#allocation6 + $0x5a8] sm:$0xff]
        %v1480 = vld [vmem:[#allocation6 + $0x5b0] sm:$0xff]
        %v1481 = vld [vmem:[#allocation6 + $0x5b8] sm:$0xff]
        %v1482 = vld [vmem:[#allocation6 + $0x5c0] sm:$0xff]
        %v1483 = vld [vmem:[#allocation6 + $0x5c8] sm:$0xff]
        %v1484 = vld [vmem:[#allocation6 + $0x5d0] sm:$0xff]
        %v1485 = vld [vmem:[#allocation6 + $0x5d8] sm:$0xff]
        %v1486 = vld [vmem:[#allocation6 + $0x5e0] sm:$0xff]
        %v1487 = vld [vmem:[#allocation6 + $0x5e8] sm:$0xff]
        %v1488 = vld [vmem:[#allocation6 + $0x5f0] sm:$0xff]
        %v1489 = vld [vmem:[#allocation6 + $0x5f8] sm:$0xff]
        %v1490 = vld [vmem:[#allocation8] sm:$0xf]
        %v1492 = vperm.slane %v1490, 0
        %v1493 = vperm.slane %v1490, 1
        %v1494 = vperm.slane %v1490, 2
        %v1495 = vperm.slane %v1490, 3
        %v1692 = vunpack.c.l.b16 %v1298
        %v1693 = vunpack.c.h.b16 %v1298
        %v1694 = vunpack.c.l.b16 %v1299
        %v1695 = vunpack.c.h.b16 %v1299
        %v1696 = vunpack.c.l.b16 %v1300
        %v1697 = vunpack.c.h.b16 %v1300
        %v1698 = vunpack.c.l.b16 %v1301
        %v1699 = vunpack.c.h.b16 %v1301
        %v1700 = vunpack.c.l.b16 %v1302
        %v1701 = vunpack.c.h.b16 %v1302
        %v1702 = vunpack.c.l.b16 %v1303
        %v1703 = vunpack.c.h.b16 %v1303
        %v1704 = vunpack.c.l.b16 %v1304
        %v1705 = vunpack.c.h.b16 %v1304
        %v1706 = vunpack.c.l.b16 %v1305
        %v1707 = vunpack.c.h.b16 %v1305
        %v1708 = vunpack.c.l.b16 %v1306
        %v1709 = vunpack.c.h.b16 %v1306
        %v1710 = vunpack.c.l.b16 %v1307
        %v1711 = vunpack.c.h.b16 %v1307
        %v1712 = vunpack.c.l.b16 %v1308
        %v1713 = vunpack.c.h.b16 %v1308
        %v1714 = vunpack.c.l.b16 %v1309
        %v1715 = vunpack.c.h.b16 %v1309
        %v1716 = vunpack.c.l.b16 %v1310
        %v1717 = vunpack.c.h.b16 %v1310
        %v1718 = vunpack.c.l.b16 %v1311
        %v1719 = vunpack.c.h.b16 %v1311
        %v1720 = vunpack.c.l.b16 %v1312
        %v1721 = vunpack.c.h.b16 %v1312
        %v1722 = vunpack.c.l.b16 %v1313
        %v1723 = vunpack.c.h.b16 %v1313
        %v1724 = vunpack.c.l.b16 %v1314
        %v1725 = vunpack.c.h.b16 %v1314
        %v1726 = vunpack.c.l.b16 %v1315
        %v1727 = vunpack.c.h.b16 %v1315
        %v1728 = vunpack.c.l.b16 %v1316
        %v1729 = vunpack.c.h.b16 %v1316
        %v1730 = vunpack.c.l.b16 %v1317
        %v1731 = vunpack.c.h.b16 %v1317
        %v1732 = vunpack.c.l.b16 %v1318
        %v1733 = vunpack.c.h.b16 %v1318
        %v1734 = vunpack.c.l.b16 %v1319
        %v1735 = vunpack.c.h.b16 %v1319
        %v1736 = vunpack.c.l.b16 %v1320
        %v1737 = vunpack.c.h.b16 %v1320
        %v1738 = vunpack.c.l.b16 %v1321
        %v1739 = vunpack.c.h.b16 %v1321
        %v1740 = vunpack.c.l.b16 %v1322
        %v1741 = vunpack.c.h.b16 %v1322
        %v1742 = vunpack.c.l.b16 %v1323
        %v1743 = vunpack.c.h.b16 %v1323
        %v1744 = vunpack.c.l.b16 %v1324
        %v1745 = vunpack.c.h.b16 %v1324
        %v1746 = vunpack.c.l.b16 %v1325
        %v1747 = vunpack.c.h.b16 %v1325
        %v1748 = vunpack.c.l.b16 %v1326
        %v1749 = vunpack.c.h.b16 %v1326
        %v1750 = vunpack.c.l.b16 %v1327
        %v1751 = vunpack.c.h.b16 %v1327
        %v1752 = vunpack.c.l.b16 %v1328
        %v1753 = vunpack.c.h.b16 %v1328
        %v1754 = vunpack.c.l.b16 %v1329
        %v1755 = vunpack.c.h.b16 %v1329
        %v1756 = vunpack.c.l.b16 %v1330
        %v1757 = vunpack.c.h.b16 %v1330
        %v1758 = vunpack.c.l.b16 %v1331
        %v1759 = vunpack.c.h.b16 %v1331
        %v1760 = vunpack.c.l.b16 %v1332
        %v1761 = vunpack.c.h.b16 %v1332
        %v1762 = vunpack.c.l.b16 %v1333
        %v1763 = vunpack.c.h.b16 %v1333
        %v1764 = vunpack.c.l.b16 %v1334
        %v1765 = vunpack.c.h.b16 %v1334
        %v1766 = vunpack.c.l.b16 %v1335
        %v1767 = vunpack.c.h.b16 %v1335
        %v1768 = vunpack.c.l.b16 %v1336
        %v1769 = vunpack.c.h.b16 %v1336
        %v1770 = vunpack.c.l.b16 %v1337
        %v1771 = vunpack.c.h.b16 %v1337
        %v1772 = vunpack.c.l.b16 %v1338
        %v1773 = vunpack.c.h.b16 %v1338
        %v1774 = vunpack.c.l.b16 %v1339
        %v1775 = vunpack.c.h.b16 %v1339
        %v1776 = vunpack.c.l.b16 %v1340
        %v1777 = vunpack.c.h.b16 %v1340
        %v1778 = vunpack.c.l.b16 %v1341
        %v1779 = vunpack.c.h.b16 %v1341
        %v1780 = vunpack.c.l.b16 %v1342
        %v1781 = vunpack.c.h.b16 %v1342
        %v1782 = vunpack.c.l.b16 %v1343
        %v1783 = vunpack.c.h.b16 %v1343
        %v1784 = vunpack.c.l.b16 %v1344
        %v1785 = vunpack.c.h.b16 %v1344
        %v1786 = vunpack.c.l.b16 %v1345
        %v1787 = vunpack.c.h.b16 %v1345
        %v1788 = vunpack.c.l.b16 %v1346
        %v1789 = vunpack.c.h.b16 %v1346
        %v1790 = vunpack.c.l.b16 %v1347
        %v1791 = vunpack.c.h.b16 %v1347
        %v1792 = vunpack.c.l.b16 %v1348
        %v1793 = vunpack.c.h.b16 %v1348
        %v1794 = vunpack.c.l.b16 %v1349
        %v1795 = vunpack.c.h.b16 %v1349
        %v1796 = vunpack.c.l.b16 %v1350
        %v1797 = vunpack.c.h.b16 %v1350
        %v1798 = vunpack.c.l.b16 %v1351
        %v1799 = vunpack.c.h.b16 %v1351
        %v1800 = vunpack.c.l.b16 %v1352
        %v1801 = vunpack.c.h.b16 %v1352
        %v1802 = vunpack.c.l.b16 %v1353
        %v1803 = vunpack.c.h.b16 %v1353
        %v1804 = vunpack.c.l.b16 %v1354
        %v1805 = vunpack.c.h.b16 %v1354
        %v1806 = vunpack.c.l.b16 %v1355
        %v1807 = vunpack.c.h.b16 %v1355
        %v1808 = vunpack.c.l.b16 %v1356
        %v1809 = vunpack.c.h.b16 %v1356
        %v1810 = vunpack.c.l.b16 %v1357
        %v1811 = vunpack.c.h.b16 %v1357
        %v1812 = vunpack.c.l.b16 %v1358
        %v1813 = vunpack.c.h.b16 %v1358
        %v1814 = vunpack.c.l.b16 %v1359
        %v1815 = vunpack.c.h.b16 %v1359
        %v1816 = vunpack.c.l.b16 %v1360
        %v1817 = vunpack.c.h.b16 %v1360
        %v1818 = vunpack.c.l.b16 %v1361
        %v1819 = vunpack.c.h.b16 %v1361
        %v1820 = vunpack.c.l.b16 %v1362
        %v1821 = vunpack.c.h.b16 %v1362
        %v1822 = vunpack.c.l.b16 %v1363
        %v1823 = vunpack.c.h.b16 %v1363
        %v1824 = vunpack.c.l.b16 %v1364
        %v1825 = vunpack.c.h.b16 %v1364
        %v1826 = vunpack.c.l.b16 %v1365
        %v1827 = vunpack.c.h.b16 %v1365
        %v1828 = vunpack.c.l.b16 %v1366
        %v1829 = vunpack.c.h.b16 %v1366
        %v1830 = vunpack.c.l.b16 %v1367
        %v1831 = vunpack.c.h.b16 %v1367
        %v1832 = vunpack.c.l.b16 %v1368
        %v1833 = vunpack.c.h.b16 %v1368
        %v1834 = vunpack.c.l.b16 %v1369
        %v1835 = vunpack.c.h.b16 %v1369
        %v1836 = vunpack.c.l.b16 %v1370
        %v1837 = vunpack.c.h.b16 %v1370
        %v1838 = vunpack.c.l.b16 %v1371
        %v1839 = vunpack.c.h.b16 %v1371
        %v1840 = vunpack.c.l.b16 %v1372
        %v1841 = vunpack.c.h.b16 %v1372
        %v1842 = vunpack.c.l.b16 %v1373
        %v1843 = vunpack.c.h.b16 %v1373
        %v1844 = vunpack.c.l.b16 %v1374
        %v1845 = vunpack.c.h.b16 %v1374
        %v1846 = vunpack.c.l.b16 %v1375
        %v1847 = vunpack.c.h.b16 %v1375
        %v1848 = vunpack.c.l.b16 %v1376
        %v1849 = vunpack.c.h.b16 %v1376
        %v1850 = vunpack.c.l.b16 %v1377
        %v1851 = vunpack.c.h.b16 %v1377
        %v1852 = vunpack.c.l.b16 %v1378
        %v1853 = vunpack.c.h.b16 %v1378
        %v1854 = vunpack.c.l.b16 %v1379
        %v1855 = vunpack.c.h.b16 %v1379
        %v1856 = vunpack.c.l.b16 %v1380
        %v1857 = vunpack.c.h.b16 %v1380
        %v1858 = vunpack.c.l.b16 %v1381
        %v1859 = vunpack.c.h.b16 %v1381
        %v1860 = vunpack.c.l.b16 %v1382
        %v1861 = vunpack.c.h.b16 %v1382
        %v1862 = vunpack.c.l.b16 %v1383
        %v1863 = vunpack.c.h.b16 %v1383
        %v1864 = vunpack.c.l.b16 %v1384
        %v1865 = vunpack.c.h.b16 %v1384
        %v1866 = vunpack.c.l.b16 %v1385
        %v1867 = vunpack.c.h.b16 %v1385
        %v1868 = vunpack.c.l.b16 %v1386
        %v1869 = vunpack.c.h.b16 %v1386
        %v1870 = vunpack.c.l.b16 %v1387
        %v1871 = vunpack.c.h.b16 %v1387
        %v1872 = vunpack.c.l.b16 %v1388
        %v1873 = vunpack.c.h.b16 %v1388
        %v1874 = vunpack.c.l.b16 %v1389
        %v1875 = vunpack.c.h.b16 %v1389
        %v1876 = vunpack.c.l.b16 %v1390
        %v1877 = vunpack.c.h.b16 %v1390
        %v1878 = vunpack.c.l.b16 %v1391
        %v1879 = vunpack.c.h.b16 %v1391
        %v1880 = vunpack.c.l.b16 %v1392
        %v1881 = vunpack.c.h.b16 %v1392
        %v1882 = vunpack.c.l.b16 %v1393
        %v1883 = vunpack.c.h.b16 %v1393
        %v1884 = vunpack.c.l.b16 %v1394
        %v1885 = vunpack.c.h.b16 %v1394
        %v1886 = vunpack.c.l.b16 %v1395
        %v1887 = vunpack.c.h.b16 %v1395
        %v1888 = vunpack.c.l.b16 %v1396
        %v1889 = vunpack.c.h.b16 %v1396
        %v1890 = vunpack.c.l.b16 %v1397
        %v1891 = vunpack.c.h.b16 %v1397
        %v1892 = vunpack.c.l.b16 %v1398
        %v1893 = vunpack.c.h.b16 %v1398
        %v1894 = vunpack.c.l.b16 %v1399
        %v1895 = vunpack.c.h.b16 %v1399
        %v1896 = vunpack.c.l.b16 %v1400
        %v1897 = vunpack.c.h.b16 %v1400
        %v1898 = vunpack.c.l.b16 %v1401
        %v1899 = vunpack.c.h.b16 %v1401
        %v1900 = vunpack.c.l.b16 %v1402
        %v1901 = vunpack.c.h.b16 %v1402
        %v1902 = vunpack.c.l.b16 %v1403
        %v1903 = vunpack.c.h.b16 %v1403
        %v1904 = vunpack.c.l.b16 %v1404
        %v1905 = vunpack.c.h.b16 %v1404
        %v1906 = vunpack.c.l.b16 %v1405
        %v1907 = vunpack.c.h.b16 %v1405
        %v1908 = vunpack.c.l.b16 %v1406
        %v1909 = vunpack.c.h.b16 %v1406
        %v1910 = vunpack.c.l.b16 %v1407
        %v1911 = vunpack.c.h.b16 %v1407
        %v1912 = vunpack.c.l.b16 %v1408
        %v1913 = vunpack.c.h.b16 %v1408
        %v1914 = vunpack.c.l.b16 %v1409
        %v1915 = vunpack.c.h.b16 %v1409
        %v1916 = vunpack.c.l.b16 %v1410
        %v1917 = vunpack.c.h.b16 %v1410
        %v1918 = vunpack.c.l.b16 %v1411
        %v1919 = vunpack.c.h.b16 %v1411
        %v1920 = vunpack.c.l.b16 %v1412
        %v1921 = vunpack.c.h.b16 %v1412
        %v1922 = vunpack.c.l.b16 %v1413
        %v1923 = vunpack.c.h.b16 %v1413
        %v1924 = vunpack.c.l.b16 %v1414
        %v1925 = vunpack.c.h.b16 %v1414
        %v1926 = vunpack.c.l.b16 %v1415
        %v1927 = vunpack.c.h.b16 %v1415
        %v1928 = vunpack.c.l.b16 %v1416
        %v1929 = vunpack.c.h.b16 %v1416
        %v1930 = vunpack.c.l.b16 %v1417
        %v1931 = vunpack.c.h.b16 %v1417
        %v1932 = vunpack.c.l.b16 %v1418
        %v1933 = vunpack.c.h.b16 %v1418
        %v1934 = vunpack.c.l.b16 %v1419
        %v1935 = vunpack.c.h.b16 %v1419
        %v1936 = vunpack.c.l.b16 %v1420
        %v1937 = vunpack.c.h.b16 %v1420
        %v1938 = vunpack.c.l.b16 %v1421
        %v1939 = vunpack.c.h.b16 %v1421
        %v1940 = vunpack.c.l.b16 %v1422
        %v1941 = vunpack.c.h.b16 %v1422
        %v1942 = vunpack.c.l.b16 %v1423
        %v1943 = vunpack.c.h.b16 %v1423
        %v1944 = vunpack.c.l.b16 %v1424
        %v1945 = vunpack.c.h.b16 %v1424
        %v1946 = vunpack.c.l.b16 %v1425
        %v1947 = vunpack.c.h.b16 %v1425
        %v1948 = vunpack.c.l.b16 %v1426
        %v1949 = vunpack.c.h.b16 %v1426
        %v1950 = vunpack.c.l.b16 %v1427
        %v1951 = vunpack.c.h.b16 %v1427
        %v1952 = vunpack.c.l.b16 %v1428
        %v1953 = vunpack.c.h.b16 %v1428
        %v1954 = vunpack.c.l.b16 %v1429
        %v1955 = vunpack.c.h.b16 %v1429
        %v1956 = vunpack.c.l.b16 %v1430
        %v1957 = vunpack.c.h.b16 %v1430
        %v1958 = vunpack.c.l.b16 %v1431
        %v1959 = vunpack.c.h.b16 %v1431
        %v1960 = vunpack.c.l.b16 %v1432
        %v1961 = vunpack.c.h.b16 %v1432
        %v1962 = vunpack.c.l.b16 %v1433
        %v1963 = vunpack.c.h.b16 %v1433
        %v1964 = vunpack.c.l.b16 %v1434
        %v1965 = vunpack.c.h.b16 %v1434
        %v1966 = vunpack.c.l.b16 %v1435
        %v1967 = vunpack.c.h.b16 %v1435
        %v1968 = vunpack.c.l.b16 %v1436
        %v1969 = vunpack.c.h.b16 %v1436
        %v1970 = vunpack.c.l.b16 %v1437
        %v1971 = vunpack.c.h.b16 %v1437
        %v1972 = vunpack.c.l.b16 %v1438
        %v1973 = vunpack.c.h.b16 %v1438
        %v1974 = vunpack.c.l.b16 %v1439
        %v1975 = vunpack.c.h.b16 %v1439
        %v1976 = vunpack.c.l.b16 %v1440
        %v1977 = vunpack.c.h.b16 %v1440
        %v1978 = vunpack.c.l.b16 %v1441
        %v1979 = vunpack.c.h.b16 %v1441
        %v1980 = vunpack.c.l.b16 %v1442
        %v1981 = vunpack.c.h.b16 %v1442
        %v1982 = vunpack.c.l.b16 %v1443
        %v1983 = vunpack.c.h.b16 %v1443
        %v1984 = vunpack.c.l.b16 %v1444
        %v1985 = vunpack.c.h.b16 %v1444
        %v1986 = vunpack.c.l.b16 %v1445
        %v1987 = vunpack.c.h.b16 %v1445
        %v1988 = vunpack.c.l.b16 %v1446
        %v1989 = vunpack.c.h.b16 %v1446
        %v1990 = vunpack.c.l.b16 %v1447
        %v1991 = vunpack.c.h.b16 %v1447
        %v1992 = vunpack.c.l.b16 %v1448
        %v1993 = vunpack.c.h.b16 %v1448
        %v1994 = vunpack.c.l.b16 %v1449
        %v1995 = vunpack.c.h.b16 %v1449
        %v1996 = vunpack.c.l.b16 %v1450
        %v1997 = vunpack.c.h.b16 %v1450
        %v1998 = vunpack.c.l.b16 %v1451
        %v1999 = vunpack.c.h.b16 %v1451
        %v2000 = vunpack.c.l.b16 %v1452
        %v2001 = vunpack.c.h.b16 %v1452
        %v2002 = vunpack.c.l.b16 %v1453
        %v2003 = vunpack.c.h.b16 %v1453
        %v2004 = vunpack.c.l.b16 %v1454
        %v2005 = vunpack.c.h.b16 %v1454
        %v2006 = vunpack.c.l.b16 %v1455
        %v2007 = vunpack.c.h.b16 %v1455
        %v2008 = vunpack.c.l.b16 %v1456
        %v2009 = vunpack.c.h.b16 %v1456
        %v2010 = vunpack.c.l.b16 %v1457
        %v2011 = vunpack.c.h.b16 %v1457
        %v2012 = vunpack.c.l.b16 %v1458
        %v2013 = vunpack.c.h.b16 %v1458
        %v2014 = vunpack.c.l.b16 %v1459
        %v2015 = vunpack.c.h.b16 %v1459
        %v2016 = vunpack.c.l.b16 %v1460
        %v2017 = vunpack.c.h.b16 %v1460
        %v2018 = vunpack.c.l.b16 %v1461
        %v2019 = vunpack.c.h.b16 %v1461
        %v2020 = vunpack.c.l.b16 %v1462
        %v2021 = vunpack.c.h.b16 %v1462
        %v2022 = vunpack.c.l.b16 %v1463
        %v2023 = vunpack.c.h.b16 %v1463
        %v2024 = vunpack.c.l.b16 %v1464
        %v2025 = vunpack.c.h.b16 %v1464
        %v2026 = vunpack.c.l.b16 %v1465
        %v2027 = vunpack.c.h.b16 %v1465
        %v2028 = vunpack.c.l.b16 %v1466
        %v2029 = vunpack.c.h.b16 %v1466
        %v2030 = vunpack.c.l.b16 %v1467
        %v2031 = vunpack.c.h.b16 %v1467
        %v2032 = vunpack.c.l.b16 %v1468
        %v2033 = vunpack.c.h.b16 %v1468
        %v2034 = vunpack.c.l.b16 %v1469
        %v2035 = vunpack.c.h.b16 %v1469
        %v2036 = vunpack.c.l.b16 %v1470
        %v2037 = vunpack.c.h.b16 %v1470
        %v2038 = vunpack.c.l.b16 %v1471
        %v2039 = vunpack.c.h.b16 %v1471
        %v2040 = vunpack.c.l.b16 %v1472
        %v2041 = vunpack.c.h.b16 %v1472
        %v2042 = vunpack.c.l.b16 %v1473
        %v2043 = vunpack.c.h.b16 %v1473
        %v2044 = vunpack.c.l.b16 %v1474
        %v2045 = vunpack.c.h.b16 %v1474
        %v2046 = vunpack.c.l.b16 %v1475
        %v2047 = vunpack.c.h.b16 %v1475
        %v2048 = vunpack.c.l.b16 %v1476
        %v2049 = vunpack.c.h.b16 %v1476
        %v2050 = vunpack.c.l.b16 %v1477
        %v2051 = vunpack.c.h.b16 %v1477
        %v2052 = vunpack.c.l.b16 %v1478
        %v2053 = vunpack.c.h.b16 %v1478
        %v2054 = vunpack.c.l.b16 %v1479
        %v2055 = vunpack.c.h.b16 %v1479
        %v2056 = vunpack.c.l.b16 %v1480
        %v2057 = vunpack.c.h.b16 %v1480
        %v2058 = vunpack.c.l.b16 %v1481
        %v2059 = vunpack.c.h.b16 %v1481
        %v2060 = vunpack.c.l.b16 %v1482
        %v2061 = vunpack.c.h.b16 %v1482
        %v2062 = vunpack.c.l.b16 %v1483
        %v2063 = vunpack.c.h.b16 %v1483
        %v2064 = vunpack.c.l.b16 %v1484
        %v2065 = vunpack.c.h.b16 %v1484
        %v2066 = vunpack.c.l.b16 %v1485
        %v2067 = vunpack.c.h.b16 %v1485
        %v2068 = vunpack.c.l.b16 %v1486
        %v2069 = vunpack.c.h.b16 %v1486
        %v2070 = vunpack.c.l.b16 %v1487
        %v2071 = vunpack.c.h.b16 %v1487
        %v2072 = vunpack.c.l.b16 %v1488
        %v2073 = vunpack.c.h.b16 %v1488
        %v2074 = vunpack.c.l.b16 %v1489
        %v2075 = vunpack.c.h.b16 %v1489
        %v2076 = vpack.c.b16 %v1696, %v1692
        %v2077 = vpack.c.b16 %v1697, %v1693
        %v2078 = vpack.c.b16 %v1698, %v1694
        %v2079 = vpack.c.b16 %v1699, %v1695
        %v2080 = vpack.c.b16 %v1704, %v1700
        %v2081 = vpack.c.b16 %v1705, %v1701
        %v2082 = vpack.c.b16 %v1706, %v1702
        %v2083 = vpack.c.b16 %v1707, %v1703
        %v2084 = vpack.c.b16 %v1712, %v1708
        %v2085 = vpack.c.b16 %v1713, %v1709
        %v2086 = vpack.c.b16 %v1714, %v1710
        %v2087 = vpack.c.b16 %v1715, %v1711
        %v2088 = vpack.c.b16 %v1720, %v1716
        %v2089 = vpack.c.b16 %v1721, %v1717
        %v2090 = vpack.c.b16 %v1722, %v1718
        %v2091 = vpack.c.b16 %v1723, %v1719
        %v2092 = vpack.c.b16 %v1728, %v1724
        %v2093 = vpack.c.b16 %v1729, %v1725
        %v2094 = vpack.c.b16 %v1730, %v1726
        %v2095 = vpack.c.b16 %v1731, %v1727
        %v2096 = vpack.c.b16 %v1736, %v1732
        %v2097 = vpack.c.b16 %v1737, %v1733
        %v2098 = vpack.c.b16 %v1738, %v1734
        %v2099 = vpack.c.b16 %v1739, %v1735
        %v2100 = vpack.c.b16 %v1744, %v1740
        %v2101 = vpack.c.b16 %v1745, %v1741
        %v2102 = vpack.c.b16 %v1746, %v1742
        %v2103 = vpack.c.b16 %v1747, %v1743
        %v2104 = vpack.c.b16 %v1752, %v1748
        %v2105 = vpack.c.b16 %v1753, %v1749
        %v2106 = vpack.c.b16 %v1754, %v1750
        %v2107 = vpack.c.b16 %v1755, %v1751
        %v2108 = vpack.c.b16 %v1760, %v1756
        %v2109 = vpack.c.b16 %v1761, %v1757
        %v2110 = vpack.c.b16 %v1762, %v1758
        %v2111 = vpack.c.b16 %v1763, %v1759
        %v2112 = vpack.c.b16 %v1768, %v1764
        %v2113 = vpack.c.b16 %v1769, %v1765
        %v2114 = vpack.c.b16 %v1770, %v1766
        %v2115 = vpack.c.b16 %v1771, %v1767
        %v2116 = vpack.c.b16 %v1776, %v1772
        %v2117 = vpack.c.b16 %v1777, %v1773
        %v2118 = vpack.c.b16 %v1778, %v1774
        %v2119 = vpack.c.b16 %v1779, %v1775
        %v2120 = vpack.c.b16 %v1784, %v1780
        %v2121 = vpack.c.b16 %v1785, %v1781
        %v2122 = vpack.c.b16 %v1786, %v1782
        %v2123 = vpack.c.b16 %v1787, %v1783
        %v2124 = vpack.c.b16 %v1792, %v1788
        %v2125 = vpack.c.b16 %v1793, %v1789
        %v2126 = vpack.c.b16 %v1794, %v1790
        %v2127 = vpack.c.b16 %v1795, %v1791
        %v2128 = vpack.c.b16 %v1800, %v1796
        %v2129 = vpack.c.b16 %v1801, %v1797
        %v2130 = vpack.c.b16 %v1802, %v1798
        %v2131 = vpack.c.b16 %v1803, %v1799
        %v2132 = vpack.c.b16 %v1808, %v1804
        %v2133 = vpack.c.b16 %v1809, %v1805
        %v2134 = vpack.c.b16 %v1810, %v1806
        %v2135 = vpack.c.b16 %v1811, %v1807
        %v2136 = vpack.c.b16 %v1816, %v1812
        %v2137 = vpack.c.b16 %v1817, %v1813
        %v2138 = vpack.c.b16 %v1818, %v1814
        %v2139 = vpack.c.b16 %v1819, %v1815
        %v2140 = vpack.c.b16 %v1824, %v1820
        %v2141 = vpack.c.b16 %v1825, %v1821
        %v2142 = vpack.c.b16 %v1826, %v1822
        %v2143 = vpack.c.b16 %v1827, %v1823
        %v2144 = vpack.c.b16 %v1832, %v1828
        %v2145 = vpack.c.b16 %v1833, %v1829
        %v2146 = vpack.c.b16 %v1834, %v1830
        %v2147 = vpack.c.b16 %v1835, %v1831
        %v2148 = vpack.c.b16 %v1840, %v1836
        %v2149 = vpack.c.b16 %v1841, %v1837
        %v2150 = vpack.c.b16 %v1842, %v1838
        %v2151 = vpack.c.b16 %v1843, %v1839
        %v2152 = vpack.c.b16 %v1848, %v1844
        %v2153 = vpack.c.b16 %v1849, %v1845
        %v2154 = vpack.c.b16 %v1850, %v1846
        %v2155 = vpack.c.b16 %v1851, %v1847
        %v2156 = vpack.c.b16 %v1856, %v1852
        %v2157 = vpack.c.b16 %v1857, %v1853
        %v2158 = vpack.c.b16 %v1858, %v1854
        %v2159 = vpack.c.b16 %v1859, %v1855
        %v2160 = vpack.c.b16 %v1864, %v1860
        %v2161 = vpack.c.b16 %v1865, %v1861
        %v2162 = vpack.c.b16 %v1866, %v1862
        %v2163 = vpack.c.b16 %v1867, %v1863
        %v2164 = vpack.c.b16 %v1872, %v1868
        %v2165 = vpack.c.b16 %v1873, %v1869
        %v2166 = vpack.c.b16 %v1874, %v1870
        %v2167 = vpack.c.b16 %v1875, %v1871
        %v2168 = vpack.c.b16 %v1880, %v1876
        %v2169 = vpack.c.b16 %v1881, %v1877
        %v2170 = vpack.c.b16 %v1882, %v1878
        %v2171 = vpack.c.b16 %v1883, %v1879
        %v2172 = vpack.c.b16 %v1888, %v1884
        %v2173 = vpack.c.b16 %v1889, %v1885
        %v2174 = vpack.c.b16 %v1890, %v1886
        %v2175 = vpack.c.b16 %v1891, %v1887
        %v2176 = vpack.c.b16 %v1896, %v1892
        %v2177 = vpack.c.b16 %v1897, %v1893
        %v2178 = vpack.c.b16 %v1898, %v1894
        %v2179 = vpack.c.b16 %v1899, %v1895
        %v2180 = vpack.c.b16 %v1904, %v1900
        %v2181 = vpack.c.b16 %v1905, %v1901
        %v2182 = vpack.c.b16 %v1906, %v1902
        %v2183 = vpack.c.b16 %v1907, %v1903
        %v2184 = vpack.c.b16 %v1912, %v1908
        %v2185 = vpack.c.b16 %v1913, %v1909
        %v2186 = vpack.c.b16 %v1914, %v1910
        %v2187 = vpack.c.b16 %v1915, %v1911
        %v2188 = vpack.c.b16 %v1920, %v1916
        %v2189 = vpack.c.b16 %v1921, %v1917
        %v2190 = vpack.c.b16 %v1922, %v1918
        %v2191 = vpack.c.b16 %v1923, %v1919
        %v2192 = vpack.c.b16 %v1928, %v1924
        %v2193 = vpack.c.b16 %v1929, %v1925
        %v2194 = vpack.c.b16 %v1930, %v1926
        %v2195 = vpack.c.b16 %v1931, %v1927
        %v2196 = vpack.c.b16 %v1936, %v1932
        %v2197 = vpack.c.b16 %v1937, %v1933
        %v2198 = vpack.c.b16 %v1938, %v1934
        %v2199 = vpack.c.b16 %v1939, %v1935
        %v2200 = vpack.c.b16 %v1944, %v1940
        %v2201 = vpack.c.b16 %v1945, %v1941
        %v2202 = vpack.c.b16 %v1946, %v1942
        %v2203 = vpack.c.b16 %v1947, %v1943
        %v2204 = vpack.c.b16 %v1952, %v1948
        %v2205 = vpack.c.b16 %v1953, %v1949
        %v2206 = vpack.c.b16 %v1954, %v1950
        %v2207 = vpack.c.b16 %v1955, %v1951
        %v2208 = vpack.c.b16 %v1960, %v1956
        %v2209 = vpack.c.b16 %v1961, %v1957
        %v2210 = vpack.c.b16 %v1962, %v1958
        %v2211 = vpack.c.b16 %v1963, %v1959
        %v2212 = vpack.c.b16 %v1968, %v1964
        %v2213 = vpack.c.b16 %v1969, %v1965
        %v2214 = vpack.c.b16 %v1970, %v1966
        %v2215 = vpack.c.b16 %v1971, %v1967
        %v2216 = vpack.c.b16 %v1976, %v1972
        %v2217 = vpack.c.b16 %v1977, %v1973
        %v2218 = vpack.c.b16 %v1978, %v1974
        %v2219 = vpack.c.b16 %v1979, %v1975
        %v2220 = vpack.c.b16 %v1984, %v1980
        %v2221 = vpack.c.b16 %v1985, %v1981
        %v2222 = vpack.c.b16 %v1986, %v1982
        %v2223 = vpack.c.b16 %v1987, %v1983
        %v2224 = vpack.c.b16 %v1992, %v1988
        %v2225 = vpack.c.b16 %v1993, %v1989
        %v2226 = vpack.c.b16 %v1994, %v1990
        %v2227 = vpack.c.b16 %v1995, %v1991
        %v2228 = vpack.c.b16 %v2000, %v1996
        %v2229 = vpack.c.b16 %v2001, %v1997
        %v2230 = vpack.c.b16 %v2002, %v1998
        %v2231 = vpack.c.b16 %v2003, %v1999
        %v2232 = vpack.c.b16 %v2008, %v2004
        %v2233 = vpack.c.b16 %v2009, %v2005
        %v2234 = vpack.c.b16 %v2010, %v2006
        %v2235 = vpack.c.b16 %v2011, %v2007
        %v2236 = vpack.c.b16 %v2016, %v2012
        %v2237 = vpack.c.b16 %v2017, %v2013
        %v2238 = vpack.c.b16 %v2018, %v2014
        %v2239 = vpack.c.b16 %v2019, %v2015
        %v2240 = vpack.c.b16 %v2024, %v2020
        %v2241 = vpack.c.b16 %v2025, %v2021
        %v2242 = vpack.c.b16 %v2026, %v2022
        %v2243 = vpack.c.b16 %v2027, %v2023
        %v2244 = vpack.c.b16 %v2032, %v2028
        %v2245 = vpack.c.b16 %v2033, %v2029
        %v2246 = vpack.c.b16 %v2034, %v2030
        %v2247 = vpack.c.b16 %v2035, %v2031
        %v2248 = vpack.c.b16 %v2040, %v2036
        %v2249 = vpack.c.b16 %v2041, %v2037
        %v2250 = vpack.c.b16 %v2042, %v2038
        %v2251 = vpack.c.b16 %v2043, %v2039
        %v2252 = vpack.c.b16 %v2048, %v2044
        %v2253 = vpack.c.b16 %v2049, %v2045
        %v2254 = vpack.c.b16 %v2050, %v2046
        %v2255 = vpack.c.b16 %v2051, %v2047
        %v2256 = vpack.c.b16 %v2056, %v2052
        %v2257 = vpack.c.b16 %v2057, %v2053
        %v2258 = vpack.c.b16 %v2058, %v2054
        %v2259 = vpack.c.b16 %v2059, %v2055
        %v2260 = vpack.c.b16 %v2064, %v2060
        %v2261 = vpack.c.b16 %v2065, %v2061
        %v2262 = vpack.c.b16 %v2066, %v2062
        %v2263 = vpack.c.b16 %v2067, %v2063
        %v2264 = vpack.c.b16 %v2072, %v2068
        %v2265 = vpack.c.b16 %v2073, %v2069
        %v2266 = vpack.c.b16 %v2074, %v2070
        %v2267 = vpack.c.b16 %v2075, %v2071
        %2460 = vmatpush.bf16.msra.mxu0 %v2104
        %2461 = vmatpush.bf16.msra.mxu0 %v2100
        %2462 = vmatpush.bf16.msra.mxu0 %v2096
        %2463 = vmatpush.bf16.msra.mxu0 %v2092
        %2464 = vmatpush.bf16.msra.mxu0 %v2088
        %2465 = vmatpush.bf16.msra.mxu0 %v2084
        %2466 = vmatpush.bf16.msra.mxu0 %v2080
        %2467 = vmatpush.bf16.msra.mxu0 %v2076
        %2468 = vmatmul.bf16.gmra.mxu0 %v1292
        %v2469 = vpop.f32.mrf.mxu0
        %v2470 = vadd.f32 %v1492, %v2469
        %v2471 = vpop.f32.mrf.mxu0
        %v2472 = vadd.f32 %v1492, %v2471
        %2473 = vdwg.mxu0
        %2474 = vmatpush.bf16.msra.mxu0 %v2136
        %2475 = vmatpush.bf16.msra.mxu0 %v2132
        %2476 = vmatpush.bf16.msra.mxu0 %v2128
        %2477 = vmatpush.bf16.msra.mxu0 %v2124
        %2478 = vmatpush.bf16.msra.mxu0 %v2120
        %2479 = vmatpush.bf16.msra.mxu0 %v2116
        %2480 = vmatpush.bf16.msra.mxu0 %v2112
        %2481 = vmatpush.bf16.msra.mxu0 %v2108
        %2482 = vmatmul.bf16.gmra.mxu0 %v1293
        %v2483 = vpop.f32.mrf.mxu0
        %v2484 = vadd.f32 %v2470, %v2483
        %v2485 = vpop.f32.mrf.mxu0
        %v2486 = vadd.f32 %v2472, %v2485
        %2487 = vdwg.mxu0
        %2488 = vmatpush.bf16.msra.mxu0 %v2168
        %2489 = vmatpush.bf16.msra.mxu0 %v2164
        %2490 = vmatpush.bf16.msra.mxu0 %v2160
        %2491 = vmatpush.bf16.msra.mxu0 %v2156
        %2492 = vmatpush.bf16.msra.mxu0 %v2152
        %2493 = vmatpush.bf16.msra.mxu0 %v2148
        %2494 = vmatpush.bf16.msra.mxu0 %v2144
        %2495 = vmatpush.bf16.msra.mxu0 %v2140
        %2496 = vmatmul.bf16.gmra.mxu0 %v1294
        %v2497 = vpop.f32.mrf.mxu0
        %v2498 = vadd.f32 %v2484, %v2497
        %v2499 = vpop.f32.mrf.mxu0
        %v2500 = vadd.f32 %v2486, %v2499
        %2501 = vdwg.mxu0
        %2502 = vmatpush.bf16.msra.mxu0 %v2200
        %2503 = vmatpush.bf16.msra.mxu0 %v2196
        %2504 = vmatpush.bf16.msra.mxu0 %v2192
        %2505 = vmatpush.bf16.msra.mxu0 %v2188
        %2506 = vmatpush.bf16.msra.mxu0 %v2184
        %2507 = vmatpush.bf16.msra.mxu0 %v2180
        %2508 = vmatpush.bf16.msra.mxu0 %v2176
        %2509 = vmatpush.bf16.msra.mxu0 %v2172
        %2510 = vmatmul.bf16.gmra.mxu0 %v1295
        %v2511 = vpop.f32.mrf.mxu0
        %v2512 = vadd.f32 %v2498, %v2511
        %v2513 = vpop.f32.mrf.mxu0
        %v2514 = vadd.f32 %v2500, %v2513
        %2515 = vdwg.mxu0
        %2516 = vmatpush.bf16.msra.mxu0 %v2232
        %2517 = vmatpush.bf16.msra.mxu0 %v2228
        %2518 = vmatpush.bf16.msra.mxu0 %v2224
        %2519 = vmatpush.bf16.msra.mxu0 %v2220
        %2520 = vmatpush.bf16.msra.mxu0 %v2216
        %2521 = vmatpush.bf16.msra.mxu0 %v2212
        %2522 = vmatpush.bf16.msra.mxu0 %v2208
        %2523 = vmatpush.bf16.msra.mxu0 %v2204
        %2524 = vmatmul.bf16.gmra.mxu0 %v1296
        %v2525 = vpop.f32.mrf.mxu0
        %v2526 = vadd.f32 %v2512, %v2525
        %v2527 = vpop.f32.mrf.mxu0
        %v2528 = vadd.f32 %v2514, %v2527
        %2529 = vdwg.mxu0
        %2530 = vmatpush.bf16.msra.mxu0 %v2264
        %2531 = vmatpush.bf16.msra.mxu0 %v2260
        %2532 = vmatpush.bf16.msra.mxu0 %v2256
        %2533 = vmatpush.bf16.msra.mxu0 %v2252
        %2534 = vmatpush.bf16.msra.mxu0 %v2248
        %2535 = vmatpush.bf16.msra.mxu0 %v2244
        %2536 = vmatpush.bf16.msra.mxu0 %v2240
        %2537 = vmatpush.bf16.msra.mxu0 %v2236
        %2538 = vmatmul.bf16.gmra.mxu0 %v1297
        %v2539 = vpop.f32.mrf.mxu0
        %v2540 = vadd.f32 %v2526, %v2539
        %v2541 = vpop.f32.mrf.mxu0
        %v2542 = vadd.f32 %v2528, %v2541
        %2543 = vdwg.mxu0
        %2544 = vmatpush.bf16.msra.mxu0 %v2105
        %2545 = vmatpush.bf16.msra.mxu0 %v2101
        %2546 = vmatpush.bf16.msra.mxu0 %v2097
        %2547 = vmatpush.bf16.msra.mxu0 %v2093
        %2548 = vmatpush.bf16.msra.mxu0 %v2089
        %2549 = vmatpush.bf16.msra.mxu0 %v2085
        %2550 = vmatpush.bf16.msra.mxu0 %v2081
        %2551 = vmatpush.bf16.msra.mxu0 %v2077
        %2552 = vmatmul.bf16.gmra.mxu0 %v1292
        %v2553 = vpop.f32.mrf.mxu0
        %v2554 = vadd.f32 %v1493, %v2553
        %v2555 = vpop.f32.mrf.mxu0
        %v2556 = vadd.f32 %v1493, %v2555
        %2557 = vdwg.mxu0
        %2558 = vmatpush.bf16.msra.mxu0 %v2137
        %2559 = vmatpush.bf16.msra.mxu0 %v2133
        %2560 = vmatpush.bf16.msra.mxu0 %v2129
        %2561 = vmatpush.bf16.msra.mxu0 %v2125
        %2562 = vmatpush.bf16.msra.mxu0 %v2121
        %2563 = vmatpush.bf16.msra.mxu0 %v2117
        %2564 = vmatpush.bf16.msra.mxu0 %v2113
        %2565 = vmatpush.bf16.msra.mxu0 %v2109
        %2566 = vmatmul.bf16.gmra.mxu0 %v1293
        %v2567 = vpop.f32.mrf.mxu0
        %v2568 = vadd.f32 %v2554, %v2567
        %v2569 = vpop.f32.mrf.mxu0
        %v2570 = vadd.f32 %v2556, %v2569
        %2571 = vdwg.mxu0
        %2572 = vmatpush.bf16.msra.mxu0 %v2169
        %2573 = vmatpush.bf16.msra.mxu0 %v2165
        %2574 = vmatpush.bf16.msra.mxu0 %v2161
        %2575 = vmatpush.bf16.msra.mxu0 %v2157
        %2576 = vmatpush.bf16.msra.mxu0 %v2153
        %2577 = vmatpush.bf16.msra.mxu0 %v2149
        %2578 = vmatpush.bf16.msra.mxu0 %v2145
        %2579 = vmatpush.bf16.msra.mxu0 %v2141
        %2580 = vmatmul.bf16.gmra.mxu0 %v1294
        %v2581 = vpop.f32.mrf.mxu0
        %v2582 = vadd.f32 %v2568, %v2581
        %v2583 = vpop.f32.mrf.mxu0
        %v2584 = vadd.f32 %v2570, %v2583
        %2585 = vdwg.mxu0
        %2586 = vmatpush.bf16.msra.mxu0 %v2201
        %2587 = vmatpush.bf16.msra.mxu0 %v2197
        %2588 = vmatpush.bf16.msra.mxu0 %v2193
        %2589 = vmatpush.bf16.msra.mxu0 %v2189
        %2590 = vmatpush.bf16.msra.mxu0 %v2185
        %2591 = vmatpush.bf16.msra.mxu0 %v2181
        %2592 = vmatpush.bf16.msra.mxu0 %v2177
        %2593 = vmatpush.bf16.msra.mxu0 %v2173
        %2594 = vmatmul.bf16.gmra.mxu0 %v1295
        %v2595 = vpop.f32.mrf.mxu0
        %v2596 = vadd.f32 %v2582, %v2595
        %v2597 = vpop.f32.mrf.mxu0
        %v2598 = vadd.f32 %v2584, %v2597
        %2599 = vdwg.mxu0
        %2600 = vmatpush.bf16.msra.mxu0 %v2233
        %2601 = vmatpush.bf16.msra.mxu0 %v2229
        %2602 = vmatpush.bf16.msra.mxu0 %v2225
        %2603 = vmatpush.bf16.msra.mxu0 %v2221
        %2604 = vmatpush.bf16.msra.mxu0 %v2217
        %2605 = vmatpush.bf16.msra.mxu0 %v2213
        %2606 = vmatpush.bf16.msra.mxu0 %v2209
        %2607 = vmatpush.bf16.msra.mxu0 %v2205
        %2608 = vmatmul.bf16.gmra.mxu0 %v1296
        %v2609 = vpop.f32.mrf.mxu0
        %v2610 = vadd.f32 %v2596, %v2609
        %v2611 = vpop.f32.mrf.mxu0
        %v2612 = vadd.f32 %v2598, %v2611
        %2613 = vdwg.mxu0
        %2614 = vmatpush.bf16.msra.mxu0 %v2265
        %2615 = vmatpush.bf16.msra.mxu0 %v2261
        %2616 = vmatpush.bf16.msra.mxu0 %v2257
        %2617 = vmatpush.bf16.msra.mxu0 %v2253
        %2618 = vmatpush.bf16.msra.mxu0 %v2249
        %2619 = vmatpush.bf16.msra.mxu0 %v2245
        %2620 = vmatpush.bf16.msra.mxu0 %v2241
        %2621 = vmatpush.bf16.msra.mxu0 %v2237
        %2622 = vmatmul.bf16.gmra.mxu0 %v1297
        %v2623 = vpop.f32.mrf.mxu0
        %v2624 = vadd.f32 %v2610, %v2623
        %v2625 = vpop.f32.mrf.mxu0
        %v2626 = vadd.f32 %v2612, %v2625
        %2627 = vdwg.mxu0
        %2628 = vmatpush.bf16.msra.mxu0 %v2106
        %2629 = vmatpush.bf16.msra.mxu0 %v2102
        %2630 = vmatpush.bf16.msra.mxu0 %v2098
        %2631 = vmatpush.bf16.msra.mxu0 %v2094
        %2632 = vmatpush.bf16.msra.mxu0 %v2090
        %2633 = vmatpush.bf16.msra.mxu0 %v2086
        %2634 = vmatpush.bf16.msra.mxu0 %v2082
        %2635 = vmatpush.bf16.msra.mxu0 %v2078
        %2636 = vmatmul.bf16.gmra.mxu0 %v1292
        %v2637 = vpop.f32.mrf.mxu0
        %v2638 = vadd.f32 %v1494, %v2637
        %v2639 = vpop.f32.mrf.mxu0
        %v2640 = vadd.f32 %v1494, %v2639
        %2641 = vdwg.mxu0
        %2642 = vmatpush.bf16.msra.mxu0 %v2138
        %2643 = vmatpush.bf16.msra.mxu0 %v2134
        %2644 = vmatpush.bf16.msra.mxu0 %v2130
        %2645 = vmatpush.bf16.msra.mxu0 %v2126
        %2646 = vmatpush.bf16.msra.mxu0 %v2122
        %2647 = vmatpush.bf16.msra.mxu0 %v2118
        %2648 = vmatpush.bf16.msra.mxu0 %v2114
        %2649 = vmatpush.bf16.msra.mxu0 %v2110
        %2650 = vmatmul.bf16.gmra.mxu0 %v1293
        %v2651 = vpop.f32.mrf.mxu0
        %v2652 = vadd.f32 %v2638, %v2651
        %v2653 = vpop.f32.mrf.mxu0
        %v2654 = vadd.f32 %v2640, %v2653
        %2655 = vdwg.mxu0
        %2656 = vmatpush.bf16.msra.mxu0 %v2170
        %2657 = vmatpush.bf16.msra.mxu0 %v2166
        %2658 = vmatpush.bf16.msra.mxu0 %v2162
        %2659 = vmatpush.bf16.msra.mxu0 %v2158
        %2660 = vmatpush.bf16.msra.mxu0 %v2154
        %2661 = vmatpush.bf16.msra.mxu0 %v2150
        %2662 = vmatpush.bf16.msra.mxu0 %v2146
        %2663 = vmatpush.bf16.msra.mxu0 %v2142
        %2664 = vmatmul.bf16.gmra.mxu0 %v1294
        %v2665 = vpop.f32.mrf.mxu0
        %v2666 = vadd.f32 %v2652, %v2665
        %v2667 = vpop.f32.mrf.mxu0
        %v2668 = vadd.f32 %v2654, %v2667
        %2669 = vdwg.mxu0
        %2670 = vmatpush.bf16.msra.mxu0 %v2202
        %2671 = vmatpush.bf16.msra.mxu0 %v2198
        %2672 = vmatpush.bf16.msra.mxu0 %v2194
        %2673 = vmatpush.bf16.msra.mxu0 %v2190
        %2674 = vmatpush.bf16.msra.mxu0 %v2186
        %2675 = vmatpush.bf16.msra.mxu0 %v2182
        %2676 = vmatpush.bf16.msra.mxu0 %v2178
        %2677 = vmatpush.bf16.msra.mxu0 %v2174
        %2678 = vmatmul.bf16.gmra.mxu0 %v1295
        %v2679 = vpop.f32.mrf.mxu0
        %v2680 = vadd.f32 %v2666, %v2679
        %v2681 = vpop.f32.mrf.mxu0
        %v2682 = vadd.f32 %v2668, %v2681
        %2683 = vdwg.mxu0
        %2684 = vmatpush.bf16.msra.mxu0 %v2234
        %2685 = vmatpush.bf16.msra.mxu0 %v2230
        %2686 = vmatpush.bf16.msra.mxu0 %v2226
        %2687 = vmatpush.bf16.msra.mxu0 %v2222
        %2688 = vmatpush.bf16.msra.mxu0 %v2218
        %2689 = vmatpush.bf16.msra.mxu0 %v2214
        %2690 = vmatpush.bf16.msra.mxu0 %v2210
        %2691 = vmatpush.bf16.msra.mxu0 %v2206
        %2692 = vmatmul.bf16.gmra.mxu0 %v1296
        %v2693 = vpop.f32.mrf.mxu0
        %v2694 = vadd.f32 %v2680, %v2693
        %v2695 = vpop.f32.mrf.mxu0
        %v2696 = vadd.f32 %v2682, %v2695
        %2697 = vdwg.mxu0
        %2698 = vmatpush.bf16.msra.mxu0 %v2266
        %2699 = vmatpush.bf16.msra.mxu0 %v2262
        %2700 = vmatpush.bf16.msra.mxu0 %v2258
        %2701 = vmatpush.bf16.msra.mxu0 %v2254
        %2702 = vmatpush.bf16.msra.mxu0 %v2250
        %2703 = vmatpush.bf16.msra.mxu0 %v2246
        %2704 = vmatpush.bf16.msra.mxu0 %v2242
        %2705 = vmatpush.bf16.msra.mxu0 %v2238
        %2706 = vmatmul.bf16.gmra.mxu0 %v1297
        %v2707 = vpop.f32.mrf.mxu0
        %v2708 = vadd.f32 %v2694, %v2707
        %v2709 = vpop.f32.mrf.mxu0
        %v2710 = vadd.f32 %v2696, %v2709
        %2711 = vdwg.mxu0
        %2712 = vmatpush.bf16.msra.mxu0 %v2107
        %2713 = vmatpush.bf16.msra.mxu0 %v2103
        %2714 = vmatpush.bf16.msra.mxu0 %v2099
        %2715 = vmatpush.bf16.msra.mxu0 %v2095
        %2716 = vmatpush.bf16.msra.mxu0 %v2091
        %2717 = vmatpush.bf16.msra.mxu0 %v2087
        %2718 = vmatpush.bf16.msra.mxu0 %v2083
        %2719 = vmatpush.bf16.msra.mxu0 %v2079
        %2720 = vmatmul.bf16.gmra.mxu0 %v1292
        %v2721 = vpop.f32.mrf.mxu0
        %v2722 = vadd.f32 %v1495, %v2721
        %v2723 = vpop.f32.mrf.mxu0
        %v2724 = vadd.f32 %v1495, %v2723
        %2725 = vdwg.mxu0
        %2726 = vmatpush.bf16.msra.mxu0 %v2139
        %2727 = vmatpush.bf16.msra.mxu0 %v2135
        %2728 = vmatpush.bf16.msra.mxu0 %v2131
        %2729 = vmatpush.bf16.msra.mxu0 %v2127
        %2730 = vmatpush.bf16.msra.mxu0 %v2123
        %2731 = vmatpush.bf16.msra.mxu0 %v2119
        %2732 = vmatpush.bf16.msra.mxu0 %v2115
        %2733 = vmatpush.bf16.msra.mxu0 %v2111
        %2734 = vmatmul.bf16.gmra.mxu0 %v1293
        %v2735 = vpop.f32.mrf.mxu0
        %v2736 = vadd.f32 %v2722, %v2735
        %v2737 = vpop.f32.mrf.mxu0
        %v2738 = vadd.f32 %v2724, %v2737
        %2739 = vdwg.mxu0
        %2740 = vmatpush.bf16.msra.mxu0 %v2171
        %2741 = vmatpush.bf16.msra.mxu0 %v2167
        %2742 = vmatpush.bf16.msra.mxu0 %v2163
        %2743 = vmatpush.bf16.msra.mxu0 %v2159
        %2744 = vmatpush.bf16.msra.mxu0 %v2155
        %2745 = vmatpush.bf16.msra.mxu0 %v2151
        %2746 = vmatpush.bf16.msra.mxu0 %v2147
        %2747 = vmatpush.bf16.msra.mxu0 %v2143
        %2748 = vmatmul.bf16.gmra.mxu0 %v1294
        %v2749 = vpop.f32.mrf.mxu0
        %v2750 = vadd.f32 %v2736, %v2749
        %v2751 = vpop.f32.mrf.mxu0
        %v2752 = vadd.f32 %v2738, %v2751
        %2753 = vdwg.mxu0
        %2754 = vmatpush.bf16.msra.mxu0 %v2203
        %2755 = vmatpush.bf16.msra.mxu0 %v2199
        %2756 = vmatpush.bf16.msra.mxu0 %v2195
        %2757 = vmatpush.bf16.msra.mxu0 %v2191
        %2758 = vmatpush.bf16.msra.mxu0 %v2187
        %2759 = vmatpush.bf16.msra.mxu0 %v2183
        %2760 = vmatpush.bf16.msra.mxu0 %v2179
        %2761 = vmatpush.bf16.msra.mxu0 %v2175
        %2762 = vmatmul.bf16.gmra.mxu0 %v1295
        %v2763 = vpop.f32.mrf.mxu0
        %v2764 = vadd.f32 %v2750, %v2763
        %v2765 = vpop.f32.mrf.mxu0
        %v2766 = vadd.f32 %v2752, %v2765
        %2767 = vdwg.mxu0
        %2768 = vmatpush.bf16.msra.mxu0 %v2235
        %2769 = vmatpush.bf16.msra.mxu0 %v2231
        %2770 = vmatpush.bf16.msra.mxu0 %v2227
        %2771 = vmatpush.bf16.msra.mxu0 %v2223
        %2772 = vmatpush.bf16.msra.mxu0 %v2219
        %2773 = vmatpush.bf16.msra.mxu0 %v2215
        %2774 = vmatpush.bf16.msra.mxu0 %v2211
        %2775 = vmatpush.bf16.msra.mxu0 %v2207
        %2776 = vmatmul.bf16.gmra.mxu0 %v1296
        %v2777 = vpop.f32.mrf.mxu0
        %v2778 = vadd.f32 %v2764, %v2777
        %v2779 = vpop.f32.mrf.mxu0
        %v2780 = vadd.f32 %v2766, %v2779
        %2781 = vdwg.mxu0
        %2782 = vmatpush.bf16.msra.mxu0 %v2267
        %2783 = vmatpush.bf16.msra.mxu0 %v2263
        %2784 = vmatpush.bf16.msra.mxu0 %v2259
        %2785 = vmatpush.bf16.msra.mxu0 %v2255
        %2786 = vmatpush.bf16.msra.mxu0 %v2251
        %2787 = vmatpush.bf16.msra.mxu0 %v2247
        %2788 = vmatpush.bf16.msra.mxu0 %v2243
        %2789 = vmatpush.bf16.msra.mxu0 %v2239
        %2790 = vmatmul.bf16.gmra.mxu0 %v1297
        %v2791 = vpop.f32.mrf.mxu0
        %v2792 = vadd.f32 %v2778, %v2791
        %v2793 = vpop.f32.mrf.mxu0
        %v2794 = vadd.f32 %v2780, %v2793
        %2795 = vdwg.mxu0
        %v2796 = vmax.f32 %v2540, 0.0
        %v2797 = vmax.f32 %v2624, 0.0
        %v2798 = vmax.f32 %v2708, 0.0
        %v2799 = vmax.f32 %v2792, 0.0
        %v2800 = vmax.f32 %v2542, 0.0
        %v2801 = vmax.f32 %v2626, 0.0
        %v2802 = vmax.f32 %v2710, 0.0
        %v2803 = vmax.f32 %v2794, 0.0
        %v2804 = vpack.c.bf16 %v2800, %v2796
        %v2805 = vpack.c.bf16 %v2801, %v2797
        %v2806 = vpack.c.bf16 %v2802, %v2798
        %v2807 = vpack.c.bf16 %v2803, %v2799
        %v2808 = vld [vmem:[#allocation9] sm:$0xf]
        %v2809 = vld [vmem:[#allocation9 + $0x4] sm:$0xf]
        %v2810 = vld [vmem:[#allocation9 + $0x8] sm:$0xf]
        %v2811 = vld [vmem:[#allocation9 + $0xc] sm:$0xf]
        %v2812 = vld [vmem:[#allocation9 + $0x10] sm:$0xf]
        %v2813 = vld [vmem:[#allocation9 + $0x14] sm:$0xf]
        %v2814 = vld [vmem:[#allocation9 + $0x18] sm:$0xf]
        %v2815 = vld [vmem:[#allocation9 + $0x1c] sm:$0xf]
        %v2816 = vld [vmem:[#allocation9 + $0x20] sm:$0xf]
        %v2817 = vld [vmem:[#allocation9 + $0x24] sm:$0xf]
        %v2818 = vld [vmem:[#allocation9 + $0x28] sm:$0xf]
        %v2819 = vld [vmem:[#allocation9 + $0x2c] sm:$0xf]
        %v2820 = vld [vmem:[#allocation9 + $0x30] sm:$0xf]
        %v2821 = vld [vmem:[#allocation9 + $0x34] sm:$0xf]
        %v2822 = vld [vmem:[#allocation9 + $0x38] sm:$0xf]
        %v2823 = vld [vmem:[#allocation9 + $0x3c] sm:$0xf]
        %v2824 = vld [vmem:[#allocation9 + $0x40] sm:$0xf]
        %v2825 = vld [vmem:[#allocation9 + $0x44] sm:$0xf]
        %v2826 = vld [vmem:[#allocation9 + $0x48] sm:$0xf]
        %v2827 = vld [vmem:[#allocation9 + $0x4c] sm:$0xf]
        %v2828 = vld [vmem:[#allocation9 + $0x50] sm:$0xf]
        %v2829 = vld [vmem:[#allocation9 + $0x54] sm:$0xf]
        %v2830 = vld [vmem:[#allocation9 + $0x58] sm:$0xf]
        %v2831 = vld [vmem:[#allocation9 + $0x5c] sm:$0xf]
        %v2832 = vld [vmem:[#allocation9 + $0x60] sm:$0xf]
        %v2833 = vld [vmem:[#allocation9 + $0x64] sm:$0xf]
        %v2834 = vld [vmem:[#allocation9 + $0x68] sm:$0xf]
        %v2835 = vld [vmem:[#allocation9 + $0x6c] sm:$0xf]
        %v2836 = vld [vmem:[#allocation9 + $0x70] sm:$0xf]
        %v2837 = vld [vmem:[#allocation9 + $0x74] sm:$0xf]
        %v2838 = vld [vmem:[#allocation9 + $0x78] sm:$0xf]
        %v2839 = vld [vmem:[#allocation9 + $0x7c] sm:$0xf]
        %v2840 = vld [vmem:[#allocation9 + $0x80] sm:$0xf]
        %v2841 = vld [vmem:[#allocation9 + $0x84] sm:$0xf]
        %v2842 = vld [vmem:[#allocation9 + $0x88] sm:$0xf]
        %v2843 = vld [vmem:[#allocation9 + $0x8c] sm:$0xf]
        %v2844 = vld [vmem:[#allocation9 + $0x90] sm:$0xf]
        %v2845 = vld [vmem:[#allocation9 + $0x94] sm:$0xf]
        %v2846 = vld [vmem:[#allocation9 + $0x98] sm:$0xf]
        %v2847 = vld [vmem:[#allocation9 + $0x9c] sm:$0xf]
        %v2848 = vld [vmem:[#allocation9 + $0xa0] sm:$0xf]
        %v2849 = vld [vmem:[#allocation9 + $0xa4] sm:$0xf]
        %v2850 = vld [vmem:[#allocation9 + $0xa8] sm:$0xf]
        %v2851 = vld [vmem:[#allocation9 + $0xac] sm:$0xf]
        %v2852 = vld [vmem:[#allocation9 + $0xb0] sm:$0xf]
        %v2853 = vld [vmem:[#allocation9 + $0xb4] sm:$0xf]
        %v2854 = vld [vmem:[#allocation9 + $0xb8] sm:$0xf]
        %v2855 = vld [vmem:[#allocation9 + $0xbc] sm:$0xf]
        %v2856 = vld [vmem:[#allocation9 + $0xc0] sm:$0xf]
        %v2857 = vld [vmem:[#allocation9 + $0xc4] sm:$0xf]
        %v2858 = vld [vmem:[#allocation9 + $0xc8] sm:$0xf]
        %v2859 = vld [vmem:[#allocation9 + $0xcc] sm:$0xf]
        %v2860 = vld [vmem:[#allocation9 + $0xd0] sm:$0xf]
        %v2861 = vld [vmem:[#allocation9 + $0xd4] sm:$0xf]
        %v2862 = vld [vmem:[#allocation9 + $0xd8] sm:$0xf]
        %v2863 = vld [vmem:[#allocation9 + $0xdc] sm:$0xf]
        %v2864 = vld [vmem:[#allocation9 + $0xe0] sm:$0xf]
        %v2865 = vld [vmem:[#allocation9 + $0xe4] sm:$0xf]
        %v2866 = vld [vmem:[#allocation9 + $0xe8] sm:$0xf]
        %v2867 = vld [vmem:[#allocation9 + $0xec] sm:$0xf]
        %v2868 = vld [vmem:[#allocation9 + $0xf0] sm:$0xf]
        %v2869 = vld [vmem:[#allocation9 + $0xf4] sm:$0xf]
        %v2870 = vld [vmem:[#allocation9 + $0xf8] sm:$0xf]
        %v2871 = vld [vmem:[#allocation9 + $0xfc] sm:$0xf]
        %v2872 = vld [vmem:[%s6] sm:$0x1]
        %v2874 = vperm.slane %v2872, 0
        %v2940 = vunpack.c.l.b16 %v2808
        %v2941 = vunpack.c.l.b16 %v2809
        %v2942 = vunpack.c.l.b16 %v2810
        %v2943 = vunpack.c.l.b16 %v2811
        %v2944 = vunpack.c.l.b16 %v2812
        %v2945 = vunpack.c.l.b16 %v2813
        %v2946 = vunpack.c.l.b16 %v2814
        %v2947 = vunpack.c.l.b16 %v2815
        %v2948 = vunpack.c.l.b16 %v2816
        %v2949 = vunpack.c.l.b16 %v2817
        %v2950 = vunpack.c.l.b16 %v2818
        %v2951 = vunpack.c.l.b16 %v2819
        %v2952 = vunpack.c.l.b16 %v2820
        %v2953 = vunpack.c.l.b16 %v2821
        %v2954 = vunpack.c.l.b16 %v2822
        %v2955 = vunpack.c.l.b16 %v2823
        %v2956 = vunpack.c.l.b16 %v2824
        %v2957 = vunpack.c.l.b16 %v2825
        %v2958 = vunpack.c.l.b16 %v2826
        %v2959 = vunpack.c.l.b16 %v2827
        %v2960 = vunpack.c.l.b16 %v2828
        %v2961 = vunpack.c.l.b16 %v2829
        %v2962 = vunpack.c.l.b16 %v2830
        %v2963 = vunpack.c.l.b16 %v2831
        %v2964 = vunpack.c.l.b16 %v2832
        %v2965 = vunpack.c.l.b16 %v2833
        %v2966 = vunpack.c.l.b16 %v2834
        %v2967 = vunpack.c.l.b16 %v2835
        %v2968 = vunpack.c.l.b16 %v2836
        %v2969 = vunpack.c.l.b16 %v2837
        %v2970 = vunpack.c.l.b16 %v2838
        %v2971 = vunpack.c.l.b16 %v2839
        %v2972 = vunpack.c.l.b16 %v2840
        %v2973 = vunpack.c.l.b16 %v2841
        %v2974 = vunpack.c.l.b16 %v2842
        %v2975 = vunpack.c.l.b16 %v2843
        %v2976 = vunpack.c.l.b16 %v2844
        %v2977 = vunpack.c.l.b16 %v2845
        %v2978 = vunpack.c.l.b16 %v2846
        %v2979 = vunpack.c.l.b16 %v2847
        %v2980 = vunpack.c.l.b16 %v2848
        %v2981 = vunpack.c.l.b16 %v2849
        %v2982 = vunpack.c.l.b16 %v2850
        %v2983 = vunpack.c.l.b16 %v2851
        %v2984 = vunpack.c.l.b16 %v2852
        %v2985 = vunpack.c.l.b16 %v2853
        %v2986 = vunpack.c.l.b16 %v2854
        %v2987 = vunpack.c.l.b16 %v2855
        %v2988 = vunpack.c.l.b16 %v2856
        %v2989 = vunpack.c.l.b16 %v2857
        %v2990 = vunpack.c.l.b16 %v2858
        %v2991 = vunpack.c.l.b16 %v2859
        %v2992 = vunpack.c.l.b16 %v2860
        %v2993 = vunpack.c.l.b16 %v2861
        %v2994 = vunpack.c.l.b16 %v2862
        %v2995 = vunpack.c.l.b16 %v2863
        %v2996 = vunpack.c.l.b16 %v2864
        %v2997 = vunpack.c.l.b16 %v2865
        %v2998 = vunpack.c.l.b16 %v2866
        %v2999 = vunpack.c.l.b16 %v2867
        %v3000 = vunpack.c.l.b16 %v2868
        %v3001 = vunpack.c.l.b16 %v2869
        %v3002 = vunpack.c.l.b16 %v2870
        %v3003 = vunpack.c.l.b16 %v2871
        %v3004 = vpack.c.b16 %v2941, %v2940
        %v3005 = vpack.c.b16 %v2943, %v2942
        %v3006 = vpack.c.b16 %v2945, %v2944
        %v3007 = vpack.c.b16 %v2947, %v2946
        %v3008 = vpack.c.b16 %v2949, %v2948
        %v3009 = vpack.c.b16 %v2951, %v2950
        %v3010 = vpack.c.b16 %v2953, %v2952
        %v3011 = vpack.c.b16 %v2955, %v2954
        %v3012 = vpack.c.b16 %v2957, %v2956
        %v3013 = vpack.c.b16 %v2959, %v2958
        %v3014 = vpack.c.b16 %v2961, %v2960
        %v3015 = vpack.c.b16 %v2963, %v2962
        %v3016 = vpack.c.b16 %v2965, %v2964
        %v3017 = vpack.c.b16 %v2967, %v2966
        %v3018 = vpack.c.b16 %v2969, %v2968
        %v3019 = vpack.c.b16 %v2971, %v2970
        %v3020 = vpack.c.b16 %v2973, %v2972
        %v3021 = vpack.c.b16 %v2975, %v2974
        %v3022 = vpack.c.b16 %v2977, %v2976
        %v3023 = vpack.c.b16 %v2979, %v2978
        %v3024 = vpack.c.b16 %v2981, %v2980
        %v3025 = vpack.c.b16 %v2983, %v2982
        %v3026 = vpack.c.b16 %v2985, %v2984
        %v3027 = vpack.c.b16 %v2987, %v2986
        %v3028 = vpack.c.b16 %v2989, %v2988
        %v3029 = vpack.c.b16 %v2991, %v2990
        %v3030 = vpack.c.b16 %v2993, %v2992
        %v3031 = vpack.c.b16 %v2995, %v2994
        %v3032 = vpack.c.b16 %v2997, %v2996
        %v3033 = vpack.c.b16 %v2999, %v2998
        %v3034 = vpack.c.b16 %v3001, %v3000
        %v3035 = vpack.c.b16 %v3003, %v3002
        %3068 = vmatpush.bf16.msra.mxu0 %v3011
        %3069 = vmatpush.bf16.msra.mxu0 %v3010
        %3070 = vmatpush.bf16.msra.mxu0 %v3009
        %3071 = vmatpush.bf16.msra.mxu0 %v3008
        %3072 = vmatpush.bf16.msra.mxu0 %v3007
        %3073 = vmatpush.bf16.msra.mxu0 %v3006
        %3074 = vmatpush.bf16.msra.mxu0 %v3005
        %3075 = vmatpush.bf16.msra.mxu0 %v3004
        %3076 = vmatmul.bf16.gmra.mxu0 %v2804
        %v3077 = vpop.f32.mrf.mxu0
        %v3078 = vadd.f32 %v2874, %v3077
        %v3079 = vpop.f32.mrf.mxu0
        %v3080 = vadd.f32 %v2874, %v3079
        %3081 = vdwg.mxu0
        %3082 = vmatpush.bf16.msra.mxu0 %v3019
        %3083 = vmatpush.bf16.msra.mxu0 %v3018
        %3084 = vmatpush.bf16.msra.mxu0 %v3017
        %3085 = vmatpush.bf16.msra.mxu0 %v3016
        %3086 = vmatpush.bf16.msra.mxu0 %v3015
        %3087 = vmatpush.bf16.msra.mxu0 %v3014
        %3088 = vmatpush.bf16.msra.mxu0 %v3013
        %3089 = vmatpush.bf16.msra.mxu0 %v3012
        %3090 = vmatmul.bf16.gmra.mxu0 %v2805
        %v3091 = vpop.f32.mrf.mxu0
        %v3092 = vadd.f32 %v3078, %v3091
        %v3093 = vpop.f32.mrf.mxu0
        %v3094 = vadd.f32 %v3080, %v3093
        %3095 = vdwg.mxu0
        %3096 = vmatpush.bf16.msra.mxu0 %v3027
        %3097 = vmatpush.bf16.msra.mxu0 %v3026
        %3098 = vmatpush.bf16.msra.mxu0 %v3025
        %3099 = vmatpush.bf16.msra.mxu0 %v3024
        %3100 = vmatpush.bf16.msra.mxu0 %v3023
        %3101 = vmatpush.bf16.msra.mxu0 %v3022
        %3102 = vmatpush.bf16.msra.mxu0 %v3021
        %3103 = vmatpush.bf16.msra.mxu0 %v3020
        %3104 = vmatmul.bf16.gmra.mxu0 %v2806
        %v3105 = vpop.f32.mrf.mxu0
        %v3106 = vadd.f32 %v3092, %v3105
        %v3107 = vpop.f32.mrf.mxu0
        %v3108 = vadd.f32 %v3094, %v3107
        %3109 = vdwg.mxu0
        %3110 = vmatpush.bf16.msra.mxu0 %v3035
        %3111 = vmatpush.bf16.msra.mxu0 %v3034
        %3112 = vmatpush.bf16.msra.mxu0 %v3033
        %3113 = vmatpush.bf16.msra.mxu0 %v3032
        %3114 = vmatpush.bf16.msra.mxu0 %v3031
        %3115 = vmatpush.bf16.msra.mxu0 %v3030
        %3116 = vmatpush.bf16.msra.mxu0 %v3029
        %3117 = vmatpush.bf16.msra.mxu0 %v3028
        %3118 = vmatmul.bf16.gmra.mxu0 %v2807
        %v3119 = vpop.f32.mrf.mxu0
        %v3120 = vadd.f32 %v3106, %v3119
        %v3121 = vpop.f32.mrf.mxu0
        %v3122 = vadd.f32 %v3108, %v3121
        %3123 = vdwg.mxu0
        %v3124 = vpack.c.bf16 %v3122, %v3120
        %v3125 = vld [vmem:[%s7] sm:$0xf]
        %v3126 = vld [vmem:[%s7 + $0x4] sm:$0xf]
        %v3127 = vld [vmem:[%s7 + $0x8] sm:$0xf]
        %v3128 = vld [vmem:[%s7 + $0xc] sm:$0xf]
        %v3129 = vld [vmem:[%s7 + $0x10] sm:$0xf]
        %v3130 = vld [vmem:[%s7 + $0x14] sm:$0xf]
        %v3131 = vld [vmem:[%s7 + $0x18] sm:$0xf]
        %v3132 = vld [vmem:[%s7 + $0x1c] sm:$0xf]
        %v3133 = vld [vmem:[%s7 + $0x20] sm:$0xf]
        %v3134 = vld [vmem:[%s7 + $0x24] sm:$0xf]
        %v3135 = vld [vmem:[%s7 + $0x28] sm:$0xf]
        %v3136 = vld [vmem:[%s7 + $0x2c] sm:$0xf]
        %v3137 = vld [vmem:[%s7 + $0x30] sm:$0xf]
        %v3138 = vld [vmem:[%s7 + $0x34] sm:$0xf]
        %v3139 = vld [vmem:[%s7 + $0x38] sm:$0xf]
        %v3140 = vld [vmem:[%s7 + $0x3c] sm:$0xf]
        %v3141 = vld [vmem:[%s8] sm:$0x1]
        %v3143 = vperm.slane %v3141, 0
        %v3161 = vunpack.c.l.b16 %v3125
        %v3162 = vunpack.c.l.b16 %v3126
        %v3163 = vunpack.c.l.b16 %v3127
        %v3164 = vunpack.c.l.b16 %v3128
        %v3165 = vunpack.c.l.b16 %v3129
        %v3166 = vunpack.c.l.b16 %v3130
        %v3167 = vunpack.c.l.b16 %v3131
        %v3168 = vunpack.c.l.b16 %v3132
        %v3169 = vunpack.c.l.b16 %v3133
        %v3170 = vunpack.c.l.b16 %v3134
        %v3171 = vunpack.c.l.b16 %v3135
        %v3172 = vunpack.c.l.b16 %v3136
        %v3173 = vunpack.c.l.b16 %v3137
        %v3174 = vunpack.c.l.b16 %v3138
        %v3175 = vunpack.c.l.b16 %v3139
        %v3176 = vunpack.c.l.b16 %v3140
        %v3177 = vpack.c.b16 %v3162, %v3161
        %v3178 = vpack.c.b16 %v3164, %v3163
        %v3179 = vpack.c.b16 %v3166, %v3165
        %v3180 = vpack.c.b16 %v3168, %v3167
        %v3181 = vpack.c.b16 %v3170, %v3169
        %v3182 = vpack.c.b16 %v3172, %v3171
        %v3183 = vpack.c.b16 %v3174, %v3173
        %v3184 = vpack.c.b16 %v3176, %v3175
        %3193 = vmatpush.bf16.msra.mxu0 %v3184
        %3194 = vmatpush.bf16.msra.mxu0 %v3183
        %3195 = vmatpush.bf16.msra.mxu0 %v3182
        %3196 = vmatpush.bf16.msra.mxu0 %v3181
        %3197 = vmatpush.bf16.msra.mxu0 %v3180
        %3198 = vmatpush.bf16.msra.mxu0 %v3179
        %3199 = vmatpush.bf16.msra.mxu0 %v3178
        %3200 = vmatpush.bf16.msra.mxu0 %v3177
        %3201 = vmatmul.bf16.gmra.mxu0 %v3124
        %v3202 = vpop.f32.mrf.mxu0
        %v3203 = vadd.f32 %v3143, %v3202
        %v3204 = vpop.f32.mrf.mxu0
        %v3205 = vadd.f32 %v3143, %v3204
        %3206 = vdwg.mxu0
        %v3207 = vmax.f32 %v3203, 0.0
        %v3208 = vmax.f32 %v3205, 0.0
        %v3209 = vpack.c.bf16 %v3208, %v3207
        %v3210 = vld [vmem:[%s9] sm:$0xf]
        %v3211 = vld [vmem:[%s9 + $0x4] sm:$0xf]
        %v3212 = vld [vmem:[%s9 + $0x8] sm:$0xf]
        %v3213 = vld [vmem:[%s9 + $0xc] sm:$0xf]
        %v3214 = vld [vmem:[%s9 + $0x10] sm:$0xf]
        %v3215 = vld [vmem:[%s9 + $0x14] sm:$0xf]
        %v3216 = vld [vmem:[%s9 + $0x18] sm:$0xf]
        %v3217 = vld [vmem:[%s9 + $0x1c] sm:$0xf]
        %v3218 = vld [vmem:[%s9 + $0x20] sm:$0xf]
        %v3219 = vld [vmem:[%s9 + $0x24] sm:$0xf]
        %v3220 = vld [vmem:[%s9 + $0x28] sm:$0xf]
        %v3221 = vld [vmem:[%s9 + $0x2c] sm:$0xf]
        %v3222 = vld [vmem:[%s9 + $0x30] sm:$0xf]
        %v3223 = vld [vmem:[%s9 + $0x34] sm:$0xf]
        %v3224 = vld [vmem:[%s9 + $0x38] sm:$0xf]
        %v3225 = vld [vmem:[%s9 + $0x3c] sm:$0xf]
        %v3226 = vld [vmem:[%s10] sm:$0x1]
        %v3228 = vperm.slane %v3226, 0
        %v3246 = vunpack.c.l.b16 %v3210
        %v3247 = vunpack.c.l.b16 %v3211
        %v3248 = vunpack.c.l.b16 %v3212
        %v3249 = vunpack.c.l.b16 %v3213
        %v3250 = vunpack.c.l.b16 %v3214
        %v3251 = vunpack.c.l.b16 %v3215
        %v3252 = vunpack.c.l.b16 %v3216
        %v3253 = vunpack.c.l.b16 %v3217
        %v3254 = vunpack.c.l.b16 %v3218
        %v3255 = vunpack.c.l.b16 %v3219
        %v3256 = vunpack.c.l.b16 %v3220
        %v3257 = vunpack.c.l.b16 %v3221
        %v3258 = vunpack.c.l.b16 %v3222
        %v3259 = vunpack.c.l.b16 %v3223
        %v3260 = vunpack.c.l.b16 %v3224
        %v3261 = vunpack.c.l.b16 %v3225
        %v3262 = vpack.c.b16 %v3247, %v3246
        %v3263 = vpack.c.b16 %v3249, %v3248
        %v3264 = vpack.c.b16 %v3251, %v3250
        %v3265 = vpack.c.b16 %v3253, %v3252
        %v3266 = vpack.c.b16 %v3255, %v3254
        %v3267 = vpack.c.b16 %v3257, %v3256
        %v3268 = vpack.c.b16 %v3259, %v3258
        %v3269 = vpack.c.b16 %v3261, %v3260
        %3278 = vmatpush.bf16.msra.mxu0 %v3269
        %3279 = vmatpush.bf16.msra.mxu0 %v3268
        %3280 = vmatpush.bf16.msra.mxu0 %v3267
        %3281 = vmatpush.bf16.msra.mxu0 %v3266
        %3282 = vmatpush.bf16.msra.mxu0 %v3265
        %3283 = vmatpush.bf16.msra.mxu0 %v3264
        %3284 = vmatpush.bf16.msra.mxu0 %v3263
        %3285 = vmatpush.bf16.msra.mxu0 %v3262
        %3286 = vmatmul.bf16.gmra.mxu0 %v3209
        %v3287 = vpop.f32.mrf.mxu0
        %v3288 = vadd.f32 %v3228, %v3287
        %v3289 = vpop.f32.mrf.mxu0
        %v3290 = vadd.f32 %v3228, %v3289
        %3291 = vdwg.mxu0
        %v3292 = vmax.f32 %v3288, 0.0
        %v3293 = vmax.f32 %v3290, 0.0
        %v3294 = vld [vmem:[%s11] sm:$0x1]
        %v3296 = vperm.slane %v3294, 0
        %v3298 = vmul.f32 %v3292, %v3296
        %v3299 = vmul.f32 %v3293, %v3296
        %vm3300 = vcmask 523264
        %v3301 = vsel %vm3300, %v3298, 0.0
        %3302 = vadd.xlane.f32.xlu0 %v3301
        %v3303 = vpop.xlane.xlu0 %3302
        %v3304 = vsel %vm3300, %v3299, 0.0
        %3305 = vadd.xlane.f32.xlu0 %v3304
        %v3306 = vpop.xlane.xlu0 %3305
        %v3307 = vld [vmem:[#allocation2] sm:$0x1]
        %3309 = vset.pattern.permute.xlu0 0
        %3310 = vperm.xlu0 %3309, %v3307
        %v3311 = vpop.permute.xlu0 %3310
        %v3313 = vperm.slane %v3311, 0
        %v3314 = vadd.f32 %v3303, %v3313
        %v3315 = vadd.f32 %v3306, %v3313
        %v3316 = vsub.f32 0.0, %v3314
        %v3317 = vsub.f32 0.0, %v3315
        %v3318 = vmul.f32 %v3316, 1.442695
        %v3319 = vpow.pop %v3318
        %v3320 = vmul.f32 %v3317, 1.442695
        %v3321 = vpow.pop %v3320
        %v3322 = vadd.f32 %v3319, 1.0
        %v3323 = vadd.f32 %v3321, 1.0
        %v3324 = vrcp.pop %v3322
        %v3325 = vrcp.pop %v3323
        %v3328 = vlaneseq
        %v3329 = vand.u32 %v3328, 127
        %v3330 = vperm.slane %v3324, %v3329
        %v3331 = vadd.s32 %v3329, 4294967288
        %v3332 = vperm.slane %v3325, %v3331
        %vm3333 = vcmask 130112
        %v3334 = vsel %vm3333, %v3332, %v3330
        %vm3336 = vcmask 122880
        %3337 = vst.msk [vmem:[%s502] sm:$0x1] %vm3336, %v3334
        %s3338 = sand.u32 %s318, 1
        %s3339 = scalar_lea.sflag [#allocation5], %s3338
        %s3340 = sand.u32 %s318, 1
        %s3341 = scalar_lea.vmem [#allocation11], %s3340
        // Predicated region
        $region89: #{tpu_custom_call.1} parent=71 // pred_check
          %p3342 = pneg %p328
        $region90: #{tpu_custom_call.1} parent=71 // pred_check_branch
          %3344 = sbr.rel (%p3342) target = $region92
        $region91: #{tpu_custom_call.1} parent=71 // pred_region
          %3346 = vsyncadd %s3339, 0
          %s3347 = scalar_lea.hbm %s13, %s32
          %s3349 = sshll.u32 %s3341, 4
          %s3350 = int_to_ptr.vmem [resolvable:$true] %s3349
          %s3351 = sshll.u32 %s3347, 4
          %s3352 = int_to_ptr.hbm [resolvable:$true] %s3351
          %3354 = dma.vmem_to_hbm [thread:$0]  %s3350, 16, %s3352, %s3339
        $region92: #{tpu_custom_call.1} parent=71 // pred_fallthru
          _
      $region72: #{tpu_custom_call.1} parent=5 // pred_fallthru
        _
      %p3355 = scmp.le.s32.totalorder 2, %s27
      // Predicated region
      $region93: #{tpu_custom_call.1} parent=5 // pred_check
        %p3356 = pneg %p3355
      $region94: #{tpu_custom_call.1} parent=5 // pred_check_branch
        %3358 = sbr.rel (%p3356) target = $region96
      $region95: #{tpu_custom_call.1} parent=5 // pred_region
        %s3359 = ssub.s32 %s27, 2
        // Predicated region
        $region97: #{tpu_custom_call.1} parent=95 // pred_check
          %p3360 = pneg %p334
        $region98: #{tpu_custom_call.1} parent=95 // pred_check_branch
          %3362 = sbr.rel (%p3360) target = $region100
        $region99: #{tpu_custom_call.1} parent=95 // pred_region
          %s3363 = sand.u32 %s319, 1
          %s3364 = scalar_lea.sflag [#allocation5], %s3363
          %s3365 = sand.u32 %s319, 1
          %s3366 = scalar_lea.vmem [#allocation11], %s3365
          %3368 = dma.done %s3364, 16
        $region100: #{tpu_custom_call.1} parent=95 // pred_fallthru
          _
      $region96: #{tpu_custom_call.1} parent=5 // pred_fallthru
        _
    $region6: #{tpu_custom_call.1} parent=1 // loop_footer
      %s31 = sadd.s32 1, %s27
    $region7: #{tpu_custom_call.1} parent=1 // loop_footer_branch
      %26 = sbr.rel target = $region3
    $region8: #{tpu_custom_call.1} parent=1 // loop_exit
      _
    %3369 = vsyncpa [#allocation4], 1
    %s3370 = scalar_lea.sflag [#allocation4], 1
    %3371 = vsyncpa %s3370, 1
    %3372 = vsyncpa [#allocation7], 1
    %3373 = vsyncpa [#allocation10], 1
    %3374 = vsyncpa [#allocation5], 1
    %s3375 = scalar_lea.sflag [#allocation5], 1
    %3376 = vsyncpa %s3375, 1

</llo_original>
